<compile_context>
chip_gen: v7x
topology: tpu7x:2x2x1
jax: 0.10.0
libtpu: 0.0.40
codegen_flags: <defaults>
</compile_context>

<pallas_src>
import numpy as np
import jax
import jax.numpy as jnp
from jax.experimental import pallas as pl
from jax.experimental.pallas import tpu as pltpu


# ----------------------------------------------------------------------------- utilities
def _silu_ref(x):
    # reference-path SiLU (pure JAX)
    return x / (1.0 + jnp.exp(-x))


def _silu_k(x):
    # kernel-path SiLU: divide moved to the EUP via approx reciprocal
    return x * pl.reciprocal(1.0 + jnp.exp(-x), approx=True)


def _round_up(x, m):
    return (x + m - 1) // m * m


def _choose_tm(M):
    # multiple of 32 (safe for bf16/f32 sublane tiling), capped at 256 rows per step
    TM = min(256, _round_up(M, 32))
    # prefer >= 2 grid blocks so ("parallel",) can shard across cores (v7x megacore)
    if _round_up(M, TM) // TM < 2 and TM > 32:
        TM = max(32, (TM // 2) // 32 * 32)
    return TM


# ----------------------------------------------------------------------------- Pallas kernel
def egnn_layer_kernel(ped_ref, hst_ref, hn_ref, rel_ref, mask_ref,
                      W8_ref, Wds_ref, Wout_ref, B_ref,
                      ped_out_ref, h_out_ref):
    f32, bf16 = jnp.float32, jnp.bfloat16
    K, TM, H = hn_ref.shape
    KTM = K * TM

    def dot(a, b):
        # bf16 MXU operands, f32 accumulation
        return jnp.dot(a.astype(bf16), b, preferred_element_type=f32)

    ped = ped_ref[...]                         # (TM, 6)  [x(2), v(2), a(2)]  f32
    hst = hst_ref[...]                         # (TM, H)  f32
    # flatten the neighbor axis into the row axis: free metadata reshape (TM % 32 == 0)
    hn = hn_ref[...].reshape(KTM, H)           # (KTM, H) bf16
    rel = rel_ref[...].reshape(KTM, 6)         # (KTM, 6) f32
    mask = mask_ref[...].reshape(KTM, 1)       # (KTM, 1) f32

    # packed weights / biases
    We1h, We1n, We2, Wx1 = W8_ref[0], W8_ref[1], W8_ref[2], W8_ref[3]
    Wa1, Wh1h, Wh1m, Wh2 = W8_ref[4], W8_ref[5], W8_ref[6], W8_ref[7]
    Wds = Wds_ref[...]                         # (2, H)  rows: [dist, speed] of fe_W1
    Wx2 = Wout_ref[:, 0:1]                     # (H, 1)
    Wa2 = Wout_ref[:, 1:2]                     # (H, 1)
    be1 = B_ref[0:1, :]; be2 = B_ref[1:2, :]; bx1 = B_ref[2:3, :]
    ba1 = B_ref[3:4, :]; bh1 = B_ref[4:5, :]; bh2 = B_ref[5:6, :]
    bx2 = B_ref[6:7, 0:1]; ba2 = B_ref[7:8, 0:1]

    # distance / relative speed (masked rows get zeroed at m_j, so unmasked rel is fine)
    sq = rel * rel
    dist = jnp.sqrt(sq[:, 0:1] + sq[:, 1:2])
    spd = jnp.sqrt(sq[:, 2:3] + sq[:, 3:4])
    ds = jnp.concatenate([dist, spd], axis=1)  # (KTM, 2)

    # f_e = Linear(2H+2,H) -> SiLU -> Linear(H,H) -> SiLU, concat split into matmuls.
    # One batched matmul over all K neighbor slots at once.
    z_hst = dot(hst, We1h)                                            # (TM, H)
    z1 = jnp.tile(z_hst, (K, 1)) + dot(hn, We1n) + dot(ds, Wds) + be1  # (KTM, H)
    a1 = _silu_k(z1)
    m_j = _silu_k(dot(a1, We2) + be2) * mask                          # m_ij[~mask] = 0

    # f_x = Linear(H,H) -> SiLU -> Linear(H,1)
    x1 = _silu_k(dot(m_j, Wx1) + bx1)
    fx = dot(x1, Wx2) + bx2                                           # (KTM, 1)
    w = rel[:, 0:2] * fx * mask                                       # (KTM, 2)

    # reduce over the K neighbor slots with static, tile-aligned row slices
    m_i = m_j[0:TM, :]
    agg_sum = w[0:TM, :]
    nnum = mask[0:TM, :]
    for k in range(1, K):
        s = k * TM
        m_i = m_i + m_j[s:s + TM, :]
        agg_sum = agg_sum + w[s:s + TM, :]
        nnum = nnum + mask[s:s + TM, :]
    agg = agg_sum / (nnum + 1e-6)                                     # (TM, 2)

    # f_a = Linear(H,H) -> SiLU -> Linear(H,1)
    a1h = _silu_k(dot(hst, Wa1) + ba1)
    fa = dot(a1h, Wa2) + ba2                                          # (TM, 1)

    a_new = fa * ped[:, 4:6] + agg
    v_new = ped[:, 2:4] + a_new
    x_new = ped[:, 0:2] + v_new

    # f_h = Linear(2H,H) -> SiLU -> Linear(H,H), concat split into two matmuls
    zh = _silu_k(dot(hst, Wh1h) + dot(m_i, Wh1m) + bh1)
    fh = dot(zh, Wh2) + bh2

    h_out_ref[...] = hst + fh
    ped_out_ref[:, 0:2] = x_new
    ped_out_ref[:, 2:4] = v_new
    ped_out_ref[:, 4:6] = a_new


# ----------------------------------------------------------------------------- Pallas wrapper
def egnn_layer_pallas(lp, ped, h_st, h_neigh, rela, mask_km):
    """ped (bs,N,6) f32, h_st (bs,N,H) f32, h_neigh (K,M,H), rela (K,M,6), mask_km (K,M)."""
    bs, N, H = h_st.shape
    K, M, _ = h_neigh.shape

    TM = _choose_tm(M)
    Mp = _round_up(M, TM)
    pad = Mp - M

    ped_f = ped.reshape(M, 6).astype(jnp.float32)
    hst_f = h_st.reshape(M, H).astype(jnp.float32)
    hn_f = h_neigh.astype(jnp.bfloat16)                       # big array -> bf16 at boundary
    rel_f = rela.astype(jnp.float32)
    msk_f = mask_km.astype(jnp.float32)[..., None]            # (K, M, 1)
    if pad:
        ped_f = jnp.pad(ped_f, ((0, pad), (0, 0)))
        hst_f = jnp.pad(hst_f, ((0, pad), (0, 0)))
        hn_f = jnp.pad(hn_f, ((0, 0), (0, pad), (0, 0)))
        rel_f = jnp.pad(rel_f, ((0, 0), (0, pad), (0, 0)))
        msk_f = jnp.pad(msk_f, ((0, 0), (0, pad), (0, 0)))

    # ---- pack weights: 8 HxH matmul weights -> one bf16 slab; biases -> one f32 slab
    We1 = lp["fe_W1"]                                         # (2H+2, H)
    W8 = jnp.stack([We1[:H], We1[H:2 * H], lp["fe_W2"], lp["fx_W1"],
                    lp["fa_W1"], lp["fh_W1"][:H], lp["fh_W1"][H:], lp["fh_W2"]],
                   axis=0).astype(jnp.bfloat16)               # (8, H, H)
    Wds = We1[2 * H:2 * H + 2].astype(jnp.bfloat16)           # (2, H): dist / speed rows
    Wout = jnp.concatenate([lp["fx_W2"], lp["fa_W2"]], axis=1).astype(jnp.bfloat16)  # (H, 2)
    B = jnp.zeros((8, H), jnp.float32)
    B = B.at[0].set(lp["fe_b1"]).at[1].set(lp["fe_b2"]).at[2].set(lp["fx_b1"])
    B = B.at[3].set(lp["fa_b1"]).at[4].set(lp["fh_b1"]).at[5].set(lp["fh_b2"])
    B = B.at[6, 0].set(lp["fx_b2"][0]).at[7, 0].set(lp["fa_b2"][0])

    grid = (Mp // TM,)
    data_specs = [
        pl.BlockSpec((TM, 6), lambda i: (i, 0)),
        pl.BlockSpec((TM, H), lambda i: (i, 0)),
        pl.BlockSpec((K, TM, H), lambda i: (0, i, 0)),
        pl.BlockSpec((K, TM, 6), lambda i: (0, i, 0)),
        pl.BlockSpec((K, TM, 1), lambda i: (0, i, 0)),
    ]
    weight_specs = [
        pl.BlockSpec((8, H, H), lambda i: (0, 0, 0)),
        pl.BlockSpec((2, H), lambda i: (0, 0)),
        pl.BlockSpec((H, 2), lambda i: (0, 0)),
        pl.BlockSpec((8, H), lambda i: (0, 0)),
    ]
    out_shape = (jax.ShapeDtypeStruct((Mp, 6), jnp.float32),
                 jax.ShapeDtypeStruct((Mp, H), jnp.float32))
    out_specs = (pl.BlockSpec((TM, 6), lambda i: (i, 0)),
                 pl.BlockSpec((TM, H), lambda i: (i, 0)))

    ped_new, h_new = pl.pallas_call(
        egnn_layer_kernel,
        out_shape=out_shape,
        grid_spec=pltpu.PrefetchScalarGridSpec(
            num_scalar_prefetch=0,
            grid=grid,
            in_specs=data_specs + weight_specs,
            out_specs=out_specs,
        ),
        compiler_params=pltpu.CompilerParams(
            dimension_semantics=("parallel",),
            # footprint per step is a few MiB; 32 MiB is safe on v5e/v6e/v7x
            vmem_limit_bytes=32 * 1024 * 1024,
        ),
    )(ped_f, hst_f, hn_f, rel_f, msk_f, W8, Wds, Wout, B)

    return ped_new[:M].reshape(bs, N, 6), h_new[:M].reshape(bs, N, H)


# ----------------------------------------------------------------------------- pure-JAX reference layer
def _mlp2(x, W1, b1, W2, b2, act_last=False):
    y = _silu_ref(x @ W1 + b1)
    y = y @ W2 + b2
    return _silu_ref(y) if act_last else y


def egnn_layer_ref(lp, ped, h_st, h_neigh_km, rela_km, mask_km):
    bs, N, H = h_st.shape
    K = mask_km.shape[0]
    h_neigh = jnp.transpose(h_neigh_km.reshape(K, bs, N, H), (1, 2, 0, 3))
    rela = jnp.transpose(rela_km.reshape(K, bs, N, 6), (1, 2, 0, 3))
    mask = jnp.transpose(mask_km.reshape(K, bs, N), (1, 2, 0))
    h_neigh = h_neigh * mask[..., None]
    rela = rela * mask[..., None]
    dists = jnp.sqrt(jnp.sum(rela[..., :2] ** 2, axis=-1))
    rspeed = jnp.sqrt(jnp.sum(rela[..., 2:4] ** 2, axis=-1))
    neigh_num = mask.sum(-1)
    hst_rep = jnp.broadcast_to(h_st[..., None, :], h_neigh.shape)
    tmp = jnp.concatenate([hst_rep, h_neigh, dists[..., None], rspeed[..., None]], -1)
    m_ij = _mlp2(tmp, lp["fe_W1"], lp["fe_b1"], lp["fe_W2"], lp["fe_b2"], True)
    m_ij = m_ij * mask[..., None]
    fx = _mlp2(m_ij, lp["fx_W1"], lp["fx_b1"], lp["fx_W2"], lp["fx_b2"])
    agg = (rela[..., :2] * fx).sum(-2) / (neigh_num[..., None] + 1e-6)
    fa = _mlp2(h_st, lp["fa_W1"], lp["fa_b1"], lp["fa_W2"], lp["fa_b2"])
    a_new = fa * ped[..., 4:6] + agg
    v_new = ped[..., 2:4] + a_new
    x_new = ped[..., :2] + v_new
    m_i = m_ij.sum(-2)
    h_new = h_st + _mlp2(jnp.concatenate([h_st, m_i], -1),
                         lp["fh_W1"], lp["fh_b1"], lp["fh_W2"], lp["fh_b2"])
    return jnp.concatenate([x_new, v_new, a_new], -1), h_new


# ----------------------------------------------------------------------------- neighbor gather (O(N*K))
def _gather_rows(arr, idx_knm):
    # arr: (bs, N, C), idx_knm: (K, bs, N) -> (K, bs, N, C)   (direct take, no (bs,N,N,.))
    gather_b = jax.vmap(lambda a, i: jnp.take(a, i, axis=0), in_axes=(0, 0))
    return jax.vmap(gather_b, in_axes=(None, 0))(arr, idx_knm)


# ----------------------------------------------------------------------------- full NetEGNN_acce forward
def net_forward(params, ped_features, neigh_mask, neigh_index, k_emb, use_pallas=True):
    bs, N, _ = ped_features.shape
    H = params["emb_W"].shape[1]
    K = neigh_index.shape[-1]
    M = bs * N
    maskf = neigh_mask.astype(jnp.float32)

    v_norm = jnp.sqrt(jnp.sum(ped_features[..., 2:4] ** 2, axis=-1, keepdims=True))
    a_norm = jnp.sqrt(jnp.sum(ped_features[..., 4:6] ** 2, axis=-1, keepdims=True))
    enc_v = v_norm @ params["encv_W"] + params["encv_b"]
    enc_a = a_norm @ params["enca_W"] + params["enca_b"]
    h_initial = jnp.concatenate([enc_v, enc_a, k_emb], axis=-1)        # (bs, N, 19)
    h_st = h_initial @ params["emb_W"] + params["emb_b"]               # (bs, N, H)

    layer_fn = egnn_layer_pallas if use_pallas else egnn_layer_ref

    idx_knm = jnp.transpose(neigh_index, (2, 0, 1))                    # (K, bs, N) — tiny
    mask_km = jnp.transpose(maskf, (2, 0, 1)).reshape(K, M)            # (K, M)     — tiny

    for lp in params["layers"]:
        # gather neighbor hidden states directly into the neighbor-major (K, M, .) layout
        h_neigh = _gather_rows(h_st, idx_knm).reshape(K, M, H)         # (K, M, H)
        # TODO(synk): DATA.Pedestrians.get_relative_quantity source not provided;
        # assumed pairwise difference rel[b,i,j] = ped[b,j] - ped[b,i].
        ped_nb = _gather_rows(ped_features, idx_knm)                   # (K, bs, N, 6)
        rela = (ped_nb - ped_features[None]).reshape(K, M, 6)          # (K, M, 6)
        ped_features, h_st = layer_fn(lp, ped_features, h_st, h_neigh, rela, mask_km)

    return ped_features[..., 4:]                                       # (bs, N, 2)


# ----------------------------------------------------------------------------- parameter init
def _linear_init(key, fan_in, fan_out):
    k1, k2 = jax.random.split(key)
    bound = 1.0 / np.sqrt(fan_in)
    W = jax.random.uniform(k1, (fan_in, fan_out), jnp.float32, -bound, bound)
    b = jax.random.uniform(k2, (fan_out,), jnp.float32, -bound, bound)
    return W, b


def init_params(key, hid=32, n_layers=3):
    in_dim = 3 + 8 + 8
    keys = jax.random.split(key, 3 + n_layers)
    encv_W, encv_b = _linear_init(keys[0], 1, 8)
    enca_W, enca_b = _linear_init(keys[1], 1, 8)
    emb_W, emb_b = _linear_init(keys[2], in_dim, hid)
    layers = []
    for l in range(n_layers):
        lk = jax.random.split(keys[3 + l], 8)
        feW1, feb1 = _linear_init(lk[0], 2 * hid + 2, hid)
        feW2, feb2 = _linear_init(lk[1], hid, hid)
        fxW1, fxb1 = _linear_init(lk[2], hid, hid)
        fxW2, fxb2 = _linear_init(lk[3], hid, 1)
        faW1, fab1 = _linear_init(lk[4], hid, hid)
        faW2, fab2 = _linear_init(lk[5], hid, 1)
        fhW1, fhb1 = _linear_init(lk[6], 2 * hid, hid)
        fhW2, fhb2 = _linear_init(lk[7], hid, hid)
        layers.append(dict(fe_W1=feW1, fe_b1=feb1, fe_W2=feW2, fe_b2=feb2,
                           fx_W1=fxW1, fx_b1=fxb1, fx_W2=fxW2, fx_b2=fxb2,
                           fa_W1=faW1, fa_b1=fab1, fa_W2=faW2, fa_b2=fab2,
                           fh_W1=fhW1, fh_b1=fhb1, fh_W2=fhW2, fh_b2=fhb2))
    return dict(encv_W=encv_W, encv_b=encv_b, enca_W=enca_W, enca_b=enca_b,
                emb_W=emb_W, emb_b=emb_b, layers=layers)


# ----------------------------------------------------------------------------- main
if __name__ == "__main__":
    key = jax.random.PRNGKey(0)
    bs, N, K, hid, n_layers = 2, 8, 4, 32, 3
    k1, k2, k3, k4, k5 = jax.random.split(key, 5)

    ped_features = 0.5 * jax.random.normal(k1, (bs, N, 6), jnp.float32)
    k_emb = 0.5 * jax.random.normal(k2, (bs, N, 3), jnp.float32)
    neigh_index = jax.random.randint(k3, (bs, N, K), 0, N, dtype=jnp.int32)
    neigh_mask = jax.random.bernoulli(k4, 0.7, (bs, N, K)).astype(jnp.float32)

    params = init_params(k5, hid=hid, n_layers=n_layers)

    out = net_forward(params, ped_features, neigh_mask, neigh_index, k_emb, use_pallas=True)
    out = jax.block_until_ready(out)

    ref = net_forward(params, ped_features, neigh_mask, neigh_index, k_emb, use_pallas=False)
    ref = jax.block_until_ready(ref)

    assert out.shape == (bs, N, 2), out.shape
    max_diff = float(np.max(np.abs(np.asarray(out) - np.asarray(ref))))
    if not np.allclose(np.asarray(out), np.asarray(ref), rtol=5e-2, atol=5e-2):
        raise AssertionError(f"Pallas kernel mismatch vs JAX reference, max abs diff = {max_diff}")

    print("KERNEL_OK")
</pallas_src>

<mosaic_0001>
module attributes {stable_mosaic.version = 11 : i64} {
  func.func @egnn_layer_kernel(%arg0: i32, %arg1: memref<32x6xf32, #tpu.memory_space<vmem>>, %arg2: memref<32x32xf32, #tpu.memory_space<vmem>>, %arg3: memref<4x32x32xbf16, #tpu.memory_space<vmem>>, %arg4: memref<4x32x6xf32, #tpu.memory_space<vmem>>, %arg5: memref<4x32x1xf32, #tpu.memory_space<vmem>>, %arg6: memref<8x32x32xbf16, #tpu.memory_space<vmem>>, %arg7: memref<2x32xbf16, #tpu.memory_space<vmem>>, %arg8: memref<32x2xbf16, #tpu.memory_space<vmem>>, %arg9: memref<8x32xf32, #tpu.memory_space<vmem>>, %arg10: memref<32x6xf32, #tpu.memory_space<vmem>>, %arg11: memref<32x32xf32, #tpu.memory_space<vmem>>) attributes {dimension_semantics = [#tpu.dimension_semantics<parallel>], iteration_bounds = array<i64: 1>, scalar_prefetch = 0 : i64, scratch_operands = 0 : i64, tpu.core_type = #tpu.core_type<tc>, window_params = [{transform_indices = @transform_0, window_bounds = array<i64: 32, 6>}, {transform_indices = @transform_1, window_bounds = array<i64: 32, 32>}, {transform_indices = @transform_2, window_bounds = array<i64: 4, 32, 32>}, {transform_indices = @transform_3, window_bounds = array<i64: 4, 32, 6>}, {transform_indices = @transform_4, window_bounds = array<i64: 4, 32, 1>}, {pipeline_mode = #tpu.pipeline_mode<synchronous>, transform_indices = @transform_5, window_bounds = array<i64: 8, 32, 32>}, {pipeline_mode = #tpu.pipeline_mode<synchronous>, transform_indices = @transform_6, window_bounds = array<i64: 2, 32>}, {pipeline_mode = #tpu.pipeline_mode<synchronous>, transform_indices = @transform_7, window_bounds = array<i64: 32, 2>}, {pipeline_mode = #tpu.pipeline_mode<synchronous>, transform_indices = @transform_8, window_bounds = array<i64: 8, 32>}, {transform_indices = @transform_9, window_bounds = array<i64: 32, 6>}, {transform_indices = @transform_10, window_bounds = array<i64: 32, 32>}]} {
    %c0 = arith.constant 0 : index
    %c0_0 = arith.constant 0 : index
    %0 = vector.load %arg1[%c0, %c0_0] : memref<32x6xf32, #tpu.memory_space<vmem>>, vector<32x6xf32>
    %c0_1 = arith.constant 0 : index
    %c0_2 = arith.constant 0 : index
    %1 = vector.load %arg2[%c0_1, %c0_2] : memref<32x32xf32, #tpu.memory_space<vmem>>, vector<32x32xf32>
    %c0_3 = arith.constant 0 : index
    %c0_4 = arith.constant 0 : index
    %c0_5 = arith.constant 0 : index
    %2 = vector.load %arg3[%c0_3, %c0_4, %c0_5] : memref<4x32x32xbf16, #tpu.memory_space<vmem>>, vector<4x32x32xbf16>
    %3 = vector.shape_cast %2 : vector<4x32x32xbf16> to vector<128x32xbf16>
    %c0_6 = arith.constant 0 : index
    %c0_7 = arith.constant 0 : index
    %c0_8 = arith.constant 0 : index
    %4 = vector.load %arg4[%c0_6, %c0_7, %c0_8] : memref<4x32x6xf32, #tpu.memory_space<vmem>>, vector<4x32x6xf32>
    %5 = vector.shape_cast %4 : vector<4x32x6xf32> to vector<128x6xf32>
    %c0_9 = arith.constant 0 : index
    %c0_10 = arith.constant 0 : index
    %c0_11 = arith.constant 0 : index
    %6 = vector.load %arg5[%c0_9, %c0_10, %c0_11] : memref<4x32x1xf32, #tpu.memory_space<vmem>>, vector<4x32x1xf32>
    %7 = vector.shape_cast %6 : vector<4x32x1xf32> to vector<128x1xf32>
    %c0_12 = arith.constant 0 : index
    %c0_13 = arith.constant 0 : index
    %c0_14 = arith.constant 0 : index
    %8 = vector.load %arg6[%c0_12, %c0_13, %c0_14] : memref<8x32x32xbf16, #tpu.memory_space<vmem>>, vector<1x32x32xbf16>
    %9 = vector.shape_cast %8 : vector<1x32x32xbf16> to vector<32x32xbf16>
    %c1 = arith.constant 1 : index
    %c0_15 = arith.constant 0 : index
    %c0_16 = arith.constant 0 : index
    %10 = vector.load %arg6[%c1, %c0_15, %c0_16] : memref<8x32x32xbf16, #tpu.memory_space<vmem>>, vector<1x32x32xbf16>
    %11 = vector.shape_cast %10 : vector<1x32x32xbf16> to vector<32x32xbf16>
    %c2 = arith.constant 2 : index
    %c0_17 = arith.constant 0 : index
    %c0_18 = arith.constant 0 : index
    %12 = vector.load %arg6[%c2, %c0_17, %c0_18] : memref<8x32x32xbf16, #tpu.memory_space<vmem>>, vector<1x32x32xbf16>
    %13 = vector.shape_cast %12 : vector<1x32x32xbf16> to vector<32x32xbf16>
    %c3 = arith.constant 3 : index
    %c0_19 = arith.constant 0 : index
    %c0_20 = arith.constant 0 : index
    %14 = vector.load %arg6[%c3, %c0_19, %c0_20] : memref<8x32x32xbf16, #tpu.memory_space<vmem>>, vector<1x32x32xbf16>
    %15 = vector.shape_cast %14 : vector<1x32x32xbf16> to vector<32x32xbf16>
    %c4 = arith.constant 4 : index
    %c0_21 = arith.constant 0 : index
    %c0_22 = arith.constant 0 : index
    %16 = vector.load %arg6[%c4, %c0_21, %c0_22] : memref<8x32x32xbf16, #tpu.memory_space<vmem>>, vector<1x32x32xbf16>
    %17 = vector.shape_cast %16 : vector<1x32x32xbf16> to vector<32x32xbf16>
    %c5 = arith.constant 5 : index
    %c0_23 = arith.constant 0 : index
    %c0_24 = arith.constant 0 : index
    %18 = vector.load %arg6[%c5, %c0_23, %c0_24] : memref<8x32x32xbf16, #tpu.memory_space<vmem>>, vector<1x32x32xbf16>
    %19 = vector.shape_cast %18 : vector<1x32x32xbf16> to vector<32x32xbf16>
    %c6 = arith.constant 6 : index
    %c0_25 = arith.constant 0 : index
    %c0_26 = arith.constant 0 : index
    %20 = vector.load %arg6[%c6, %c0_25, %c0_26] : memref<8x32x32xbf16, #tpu.memory_space<vmem>>, vector<1x32x32xbf16>
    %21 = vector.shape_cast %20 : vector<1x32x32xbf16> to vector<32x32xbf16>
    %c7 = arith.constant 7 : index
    %c0_27 = arith.constant 0 : index
    %c0_28 = arith.constant 0 : index
    %22 = vector.load %arg6[%c7, %c0_27, %c0_28] : memref<8x32x32xbf16, #tpu.memory_space<vmem>>, vector<1x32x32xbf16>
    %23 = vector.shape_cast %22 : vector<1x32x32xbf16> to vector<32x32xbf16>
    %c0_29 = arith.constant 0 : index
    %c0_30 = arith.constant 0 : index
    %24 = vector.load %arg7[%c0_29, %c0_30] : memref<2x32xbf16, #tpu.memory_space<vmem>>, vector<2x32xbf16>
    %c0_31 = arith.constant 0 : index
    %c0_32 = arith.constant 0 : index
    %25 = vector.load %arg8[%c0_31, %c0_32] : memref<32x2xbf16, #tpu.memory_space<vmem>>, vector<32x1xbf16>
    %c0_33 = arith.constant 0 : index
    %c1_34 = arith.constant 1 : index
    %26 = vector.load %arg8[%c0_33, %c1_34] : memref<32x2xbf16, #tpu.memory_space<vmem>>, vector<32x1xbf16>
    %c0_35 = arith.constant 0 : index
    %c0_36 = arith.constant 0 : index
    %27 = vector.load %arg9[%c0_35, %c0_36] : memref<8x32xf32, #tpu.memory_space<vmem>>, vector<1x32xf32>
    %c1_37 = arith.constant 1 : index
    %c0_38 = arith.constant 0 : index
    %28 = vector.load %arg9[%c1_37, %c0_38] : memref<8x32xf32, #tpu.memory_space<vmem>>, vector<1x32xf32>
    %c2_39 = arith.constant 2 : index
    %c0_40 = arith.constant 0 : index
    %29 = vector.load %arg9[%c2_39, %c0_40] : memref<8x32xf32, #tpu.memory_space<vmem>>, vector<1x32xf32>
    %c3_41 = arith.constant 3 : index
    %c0_42 = arith.constant 0 : index
    %30 = vector.load %arg9[%c3_41, %c0_42] : memref<8x32xf32, #tpu.memory_space<vmem>>, vector<1x32xf32>
    %c4_43 = arith.constant 4 : index
    %c0_44 = arith.constant 0 : index
    %31 = vector.load %arg9[%c4_43, %c0_44] : memref<8x32xf32, #tpu.memory_space<vmem>>, vector<1x32xf32>
    %c5_45 = arith.constant 5 : index
    %c0_46 = arith.constant 0 : index
    %32 = vector.load %arg9[%c5_45, %c0_46] : memref<8x32xf32, #tpu.memory_space<vmem>>, vector<1x32xf32>
    %c6_47 = arith.constant 6 : index
    %c0_48 = arith.constant 0 : index
    %33 = vector.load %arg9[%c6_47, %c0_48] : memref<8x32xf32, #tpu.memory_space<vmem>>, vector<1x1xf32>
    %c7_49 = arith.constant 7 : index
    %c0_50 = arith.constant 0 : index
    %34 = vector.load %arg9[%c7_49, %c0_50] : memref<8x32xf32, #tpu.memory_space<vmem>>, vector<1x1xf32>
    %35 = arith.mulf %5, %5 : vector<128x6xf32>
    %36 = vector.extract_strided_slice %35 {offsets = [0, 0], sizes = [128, 1], strides = [1, 1]} : vector<128x6xf32> to vector<128x1xf32>
    %37 = vector.extract_strided_slice %35 {offsets = [0, 1], sizes = [128, 1], strides = [1, 1]} : vector<128x6xf32> to vector<128x1xf32>
    %38 = arith.addf %36, %37 : vector<128x1xf32>
    %39 = math.sqrt %38 : vector<128x1xf32>
    %40 = vector.extract_strided_slice %35 {offsets = [0, 2], sizes = [128, 1], strides = [1, 1]} : vector<128x6xf32> to vector<128x1xf32>
    %41 = vector.extract_strided_slice %35 {offsets = [0, 3], sizes = [128, 1], strides = [1, 1]} : vector<128x6xf32> to vector<128x1xf32>
    %42 = arith.addf %40, %41 : vector<128x1xf32>
    %43 = math.sqrt %42 : vector<128x1xf32>
    %44 = tpu.concatenate %39, %43 in 1 : vector<128x1xf32>, vector<128x1xf32> -> vector<128x2xf32>
    %45 = arith.truncf %1 : vector<32x32xf32> to vector<32x32xbf16>
    %cst = arith.constant dense<0.000000e+00> : vector<32x32xf32>
    %46 = tpu.matmul %45, %9, %cst {dimension_numbers = #tpu.dot_dimension_numbers<[1], [0], [0], [1], [0, 0, 1, 1], [], []>} : vector<32x32xbf16>, vector<32x32xbf16>, vector<32x32xf32> -> vector<32x32xf32>
    %47 = tpu.concatenate %46, %46, %46, %46 in 0 : vector<32x32xf32>, vector<32x32xf32>, vector<32x32xf32>, vector<32x32xf32> -> vector<128x32xf32>
    %cst_51 = arith.constant dense<0.000000e+00> : vector<128x32xf32>
    %48 = tpu.matmul %3, %11, %cst_51 {dimension_numbers = #tpu.dot_dimension_numbers<[1], [0], [0], [1], [0, 0, 1, 1], [], []>} : vector<128x32xbf16>, vector<32x32xbf16>, vector<128x32xf32> -> vector<128x32xf32>
    %49 = arith.addf %47, %48 : vector<128x32xf32>
    %50 = arith.truncf %44 : vector<128x2xf32> to vector<128x2xbf16>
    %cst_52 = arith.constant dense<0.000000e+00> : vector<128x32xf32>
    %51 = tpu.matmul %50, %24, %cst_52 {dimension_numbers = #tpu.dot_dimension_numbers<[1], [0], [0], [1], [0, 0, 1, 1], [], []>} : vector<128x2xbf16>, vector<2x32xbf16>, vector<128x32xf32> -> vector<128x32xf32>
    %52 = arith.addf %49, %51 : vector<128x32xf32>
    %53 = vector.broadcast %27 : vector<1x32xf32> to vector<128x32xf32>
    %54 = arith.addf %52, %53 : vector<128x32xf32>
    %cst_53 = arith.constant 0.000000e+00 : f32
    %55 = vector.broadcast %cst_53 : f32 to vector<128x32xf32>
    %56 = arith.subf %55, %54 : vector<128x32xf32>
    %57 = math.exp %56 : vector<128x32xf32>
    %cst_54 = arith.constant 1.000000e+00 : f32
    %58 = vector.broadcast %cst_54 : f32 to vector<128x32xf32>
    %59 = arith.addf %58, %57 : vector<128x32xf32>
    %60 = tpu.reciprocal %59 {approx = true} : vector<128x32xf32> -> vector<128x32xf32>
    %61 = arith.mulf %54, %60 : vector<128x32xf32>
    %62 = arith.truncf %61 : vector<128x32xf32> to vector<128x32xbf16>
    %cst_55 = arith.constant dense<0.000000e+00> : vector<128x32xf32>
    %63 = tpu.matmul %62, %13, %cst_55 {dimension_numbers = #tpu.dot_dimension_numbers<[1], [0], [0], [1], [0, 0, 1, 1], [], []>} : vector<128x32xbf16>, vector<32x32xbf16>, vector<128x32xf32> -> vector<128x32xf32>
    %64 = vector.broadcast %28 : vector<1x32xf32> to vector<128x32xf32>
    %65 = arith.addf %63, %64 : vector<128x32xf32>
    %cst_56 = arith.constant 0.000000e+00 : f32
    %66 = vector.broadcast %cst_56 : f32 to vector<128x32xf32>
    %67 = arith.subf %66, %65 : vector<128x32xf32>
    %68 = math.exp %67 : vector<128x32xf32>
    %cst_57 = arith.constant 1.000000e+00 : f32
    %69 = vector.broadcast %cst_57 : f32 to vector<128x32xf32>
    %70 = arith.addf %69, %68 : vector<128x32xf32>
    %71 = tpu.reciprocal %70 {approx = true} : vector<128x32xf32> -> vector<128x32xf32>
    %72 = arith.mulf %65, %71 : vector<128x32xf32>
    %73 = vector.broadcast %7 : vector<128x1xf32> to vector<128x32xf32>
    %74 = arith.mulf %72, %73 : vector<128x32xf32>
    %75 = arith.truncf %74 : vector<128x32xf32> to vector<128x32xbf16>
    %cst_58 = arith.constant dense<0.000000e+00> : vector<128x32xf32>
    %76 = tpu.matmul %75, %15, %cst_58 {dimension_numbers = #tpu.dot_dimension_numbers<[1], [0], [0], [1], [0, 0, 1, 1], [], []>} : vector<128x32xbf16>, vector<32x32xbf16>, vector<128x32xf32> -> vector<128x32xf32>
    %77 = vector.broadcast %29 : vector<1x32xf32> to vector<128x32xf32>
    %78 = arith.addf %76, %77 : vector<128x32xf32>
    %cst_59 = arith.constant 0.000000e+00 : f32
    %79 = vector.broadcast %cst_59 : f32 to vector<128x32xf32>
    %80 = arith.subf %79, %78 : vector<128x32xf32>
    %81 = math.exp %80 : vector<128x32xf32>
    %cst_60 = arith.constant 1.000000e+00 : f32
    %82 = vector.broadcast %cst_60 : f32 to vector<128x32xf32>
    %83 = arith.addf %82, %81 : vector<128x32xf32>
    %84 = tpu.reciprocal %83 {approx = true} : vector<128x32xf32> -> vector<128x32xf32>
    %85 = arith.mulf %78, %84 : vector<128x32xf32>
    %86 = arith.truncf %85 : vector<128x32xf32> to vector<128x32xbf16>
    %cst_61 = arith.constant dense<0.000000e+00> : vector<128x1xf32>
    %87 = tpu.matmul %86, %25, %cst_61 {dimension_numbers = #tpu.dot_dimension_numbers<[1], [0], [0], [1], [0, 0, 1, 1], [], []>} : vector<128x32xbf16>, vector<32x1xbf16>, vector<128x1xf32> -> vector<128x1xf32>
    %88 = vector.broadcast %33 : vector<1x1xf32> to vector<128x1xf32>
    %89 = arith.addf %87, %88 : vector<128x1xf32>
    %90 = vector.extract_strided_slice %5 {offsets = [0, 0], sizes = [128, 2], strides = [1, 1]} : vector<128x6xf32> to vector<128x2xf32>
    %91 = vector.broadcast %89 : vector<128x1xf32> to vector<128x2xf32>
    %92 = arith.mulf %90, %91 : vector<128x2xf32>
    %93 = vector.broadcast %7 : vector<128x1xf32> to vector<128x2xf32>
    %94 = arith.mulf %92, %93 : vector<128x2xf32>
    %95 = vector.extract_strided_slice %74 {offsets = [0, 0], sizes = [32, 32], strides = [1, 1]} : vector<128x32xf32> to vector<32x32xf32>
    %96 = vector.extract_strided_slice %94 {offsets = [0, 0], sizes = [32, 2], strides = [1, 1]} : vector<128x2xf32> to vector<32x2xf32>
    %97 = vector.extract_strided_slice %7 {offsets = [0, 0], sizes = [32, 1], strides = [1, 1]} : vector<128x1xf32> to vector<32x1xf32>
    %98 = vector.extract_strided_slice %74 {offsets = [32, 0], sizes = [32, 32], strides = [1, 1]} : vector<128x32xf32> to vector<32x32xf32>
    %99 = arith.addf %95, %98 : vector<32x32xf32>
    %100 = vector.extract_strided_slice %94 {offsets = [32, 0], sizes = [32, 2], strides = [1, 1]} : vector<128x2xf32> to vector<32x2xf32>
    %101 = arith.addf %96, %100 : vector<32x2xf32>
    %102 = vector.extract_strided_slice %7 {offsets = [32, 0], sizes = [32, 1], strides = [1, 1]} : vector<128x1xf32> to vector<32x1xf32>
    %103 = arith.addf %97, %102 : vector<32x1xf32>
    %104 = vector.extract_strided_slice %74 {offsets = [64, 0], sizes = [32, 32], strides = [1, 1]} : vector<128x32xf32> to vector<32x32xf32>
    %105 = arith.addf %99, %104 : vector<32x32xf32>
    %106 = vector.extract_strided_slice %94 {offsets = [64, 0], sizes = [32, 2], strides = [1, 1]} : vector<128x2xf32> to vector<32x2xf32>
    %107 = arith.addf %101, %106 : vector<32x2xf32>
    %108 = vector.extract_strided_slice %7 {offsets = [64, 0], sizes = [32, 1], strides = [1, 1]} : vector<128x1xf32> to vector<32x1xf32>
    %109 = arith.addf %103, %108 : vector<32x1xf32>
    %110 = vector.extract_strided_slice %74 {offsets = [96, 0], sizes = [32, 32], strides = [1, 1]} : vector<128x32xf32> to vector<32x32xf32>
    %111 = arith.addf %105, %110 : vector<32x32xf32>
    %112 = vector.extract_strided_slice %94 {offsets = [96, 0], sizes = [32, 2], strides = [1, 1]} : vector<128x2xf32> to vector<32x2xf32>
    %113 = arith.addf %107, %112 : vector<32x2xf32>
    %114 = vector.extract_strided_slice %7 {offsets = [96, 0], sizes = [32, 1], strides = [1, 1]} : vector<128x1xf32> to vector<32x1xf32>
    %115 = arith.addf %109, %114 : vector<32x1xf32>
    %cst_62 = arith.constant 9.99999997E-7 : f32
    %116 = vector.broadcast %cst_62 : f32 to vector<32x1xf32>
    %117 = arith.addf %115, %116 : vector<32x1xf32>
    %118 = vector.broadcast %117 : vector<32x1xf32> to vector<32x2xf32>
    %119 = arith.divf %113, %118 : vector<32x2xf32>
    %120 = arith.truncf %1 : vector<32x32xf32> to vector<32x32xbf16>
    %cst_63 = arith.constant dense<0.000000e+00> : vector<32x32xf32>
    %121 = tpu.matmul %120, %17, %cst_63 {dimension_numbers = #tpu.dot_dimension_numbers<[1], [0], [0], [1], [0, 0, 1, 1], [], []>} : vector<32x32xbf16>, vector<32x32xbf16>, vector<32x32xf32> -> vector<32x32xf32>
    %122 = vector.broadcast %30 : vector<1x32xf32> to vector<32x32xf32>
    %123 = arith.addf %121, %122 : vector<32x32xf32>
    %cst_64 = arith.constant 0.000000e+00 : f32
    %124 = vector.broadcast %cst_64 : f32 to vector<32x32xf32>
    %125 = arith.subf %124, %123 : vector<32x32xf32>
    %126 = math.exp %125 : vector<32x32xf32>
    %cst_65 = arith.constant 1.000000e+00 : f32
    %127 = vector.broadcast %cst_65 : f32 to vector<32x32xf32>
    %128 = arith.addf %127, %126 : vector<32x32xf32>
    %129 = tpu.reciprocal %128 {approx = true} : vector<32x32xf32> -> vector<32x32xf32>
    %130 = arith.mulf %123, %129 : vector<32x32xf32>
    %131 = arith.truncf %130 : vector<32x32xf32> to vector<32x32xbf16>
    %cst_66 = arith.constant dense<0.000000e+00> : vector<32x1xf32>
    %132 = tpu.matmul %131, %26, %cst_66 {dimension_numbers = #tpu.dot_dimension_numbers<[1], [0], [0], [1], [0, 0, 1, 1], [], []>} : vector<32x32xbf16>, vector<32x1xbf16>, vector<32x1xf32> -> vector<32x1xf32>
    %133 = vector.broadcast %34 : vector<1x1xf32> to vector<32x1xf32>
    %134 = arith.addf %132, %133 : vector<32x1xf32>
    %135 = vector.extract_strided_slice %0 {offsets = [0, 4], sizes = [32, 2], strides = [1, 1]} : vector<32x6xf32> to vector<32x2xf32>
    %136 = vector.broadcast %134 : vector<32x1xf32> to vector<32x2xf32>
    %137 = arith.mulf %136, %135 : vector<32x2xf32>
    %138 = arith.addf %137, %119 : vector<32x2xf32>
    %139 = vector.extract_strided_slice %0 {offsets = [0, 2], sizes = [32, 2], strides = [1, 1]} : vector<32x6xf32> to vector<32x2xf32>
    %140 = arith.addf %139, %138 : vector<32x2xf32>
    %141 = vector.extract_strided_slice %0 {offsets = [0, 0], sizes = [32, 2], strides = [1, 1]} : vector<32x6xf32> to vector<32x2xf32>
    %142 = arith.addf %141, %140 : vector<32x2xf32>
    %143 = arith.truncf %1 : vector<32x32xf32> to vector<32x32xbf16>
    %cst_67 = arith.constant dense<0.000000e+00> : vector<32x32xf32>
    %144 = tpu.matmul %143, %19, %cst_67 {dimension_numbers = #tpu.dot_dimension_numbers<[1], [0], [0], [1], [0, 0, 1, 1], [], []>} : vector<32x32xbf16>, vector<32x32xbf16>, vector<32x32xf32> -> vector<32x32xf32>
    %145 = arith.truncf %111 : vector<32x32xf32> to vector<32x32xbf16>
    %cst_68 = arith.constant dense<0.000000e+00> : vector<32x32xf32>
    %146 = tpu.matmul %145, %21, %cst_68 {dimension_numbers = #tpu.dot_dimension_numbers<[1], [0], [0], [1], [0, 0, 1, 1], [], []>} : vector<32x32xbf16>, vector<32x32xbf16>, vector<32x32xf32> -> vector<32x32xf32>
    %147 = arith.addf %144, %146 : vector<32x32xf32>
    %148 = vector.broadcast %31 : vector<1x32xf32> to vector<32x32xf32>
    %149 = arith.addf %147, %148 : vector<32x32xf32>
    %cst_69 = arith.constant 0.000000e+00 : f32
    %150 = vector.broadcast %cst_69 : f32 to vector<32x32xf32>
    %151 = arith.subf %150, %149 : vector<32x32xf32>
    %152 = math.exp %151 : vector<32x32xf32>
    %cst_70 = arith.constant 1.000000e+00 : f32
    %153 = vector.broadcast %cst_70 : f32 to vector<32x32xf32>
    %154 = arith.addf %153, %152 : vector<32x32xf32>
    %155 = tpu.reciprocal %154 {approx = true} : vector<32x32xf32> -> vector<32x32xf32>
    %156 = arith.mulf %149, %155 : vector<32x32xf32>
    %157 = arith.truncf %156 : vector<32x32xf32> to vector<32x32xbf16>
    %cst_71 = arith.constant dense<0.000000e+00> : vector<32x32xf32>
    %158 = tpu.matmul %157, %23, %cst_71 {dimension_numbers = #tpu.dot_dimension_numbers<[1], [0], [0], [1], [0, 0, 1, 1], [], []>} : vector<32x32xbf16>, vector<32x32xbf16>, vector<32x32xf32> -> vector<32x32xf32>
    %159 = vector.broadcast %32 : vector<1x32xf32> to vector<32x32xf32>
    %160 = arith.addf %158, %159 : vector<32x32xf32>
    %161 = arith.addf %1, %160 : vector<32x32xf32>
    %c0_72 = arith.constant 0 : index
    %c0_73 = arith.constant 0 : index
    %162 = vector.load %arg11[%c0_72, %c0_73] : memref<32x32xf32, #tpu.memory_space<vmem>>, vector<32x32xf32>
    tpu.vector_store %arg11[%c0_72, %c0_73], %161 {strides = array<i32>} : memref<32x32xf32, #tpu.memory_space<vmem>>, vector<32x32xf32>,
    %c0_74 = arith.constant 0 : index
    %c0_75 = arith.constant 0 : index
    %163 = vector.load %arg10[%c0_74, %c0_75] : memref<32x6xf32, #tpu.memory_space<vmem>>, vector<32x2xf32>
    tpu.vector_store %arg10[%c0_74, %c0_75], %142 {strides = array<i32>} : memref<32x6xf32, #tpu.memory_space<vmem>>, vector<32x2xf32>,
    %c0_76 = arith.constant 0 : index
    %c2_77 = arith.constant 2 : index
    %164 = vector.load %arg10[%c0_76, %c2_77] : memref<32x6xf32, #tpu.memory_space<vmem>>, vector<32x2xf32>
    tpu.vector_store %arg10[%c0_76, %c2_77], %140 {strides = array<i32>} : memref<32x6xf32, #tpu.memory_space<vmem>>, vector<32x2xf32>,
    %c0_78 = arith.constant 0 : index
    %c4_79 = arith.constant 4 : index
    %165 = vector.load %arg10[%c0_78, %c4_79] : memref<32x6xf32, #tpu.memory_space<vmem>>, vector<32x2xf32>
    tpu.vector_store %arg10[%c0_78, %c4_79], %138 {strides = array<i32>} : memref<32x6xf32, #tpu.memory_space<vmem>>, vector<32x2xf32>,
    return
  }
  func.func @transform_0(%arg0: i32) -> (i32, i32) {
    %c0_i32 = arith.constant 0 : i32
    %c0_i32_0 = arith.constant 0 : i32
    return %arg0, %c0_i32 : i32, i32
  }
  func.func @transform_1(%arg0: i32) -> (i32, i32) {
    %c0_i32 = arith.constant 0 : i32
    %c0_i32_0 = arith.constant 0 : i32
    return %arg0, %c0_i32 : i32, i32
  }
  func.func @transform_2(%arg0: i32) -> (i32, i32, i32) {
    %c0_i32 = arith.constant 0 : i32
    %c0_i32_0 = arith.constant 0 : i32
    %c0_i32_1 = arith.constant 0 : i32
    return %c0_i32, %arg0, %c0_i32_0 : i32, i32, i32
  }
  func.func @transform_3(%arg0: i32) -> (i32, i32, i32) {
    %c0_i32 = arith.constant 0 : i32
    %c0_i32_0 = arith.constant 0 : i32
    %c0_i32_1 = arith.constant 0 : i32
    return %c0_i32, %arg0, %c0_i32_0 : i32, i32, i32
  }
  func.func @transform_4(%arg0: i32) -> (i32, i32, i32) {
    %c0_i32 = arith.constant 0 : i32
    %c0_i32_0 = arith.constant 0 : i32
    %c0_i32_1 = arith.constant 0 : i32
    return %c0_i32, %arg0, %c0_i32_0 : i32, i32, i32
  }
  func.func @transform_5(%arg0: i32) -> (i32, i32, i32) {
    %c0_i32 = arith.constant 0 : i32
    %c0_i32_0 = arith.constant 0 : i32
    %c0_i32_1 = arith.constant 0 : i32
    %c0_i32_2 = arith.constant 0 : i32
    return %c0_i32, %c0_i32_0, %c0_i32_1 : i32, i32, i32
  }
  func.func @transform_6(%arg0: i32) -> (i32, i32) {
    %c0_i32 = arith.constant 0 : i32
    %c0_i32_0 = arith.constant 0 : i32
    %c0_i32_1 = arith.constant 0 : i32
    return %c0_i32, %c0_i32_0 : i32, i32
  }
  func.func @transform_7(%arg0: i32) -> (i32, i32) {
    %c0_i32 = arith.constant 0 : i32
    %c0_i32_0 = arith.constant 0 : i32
    %c0_i32_1 = arith.constant 0 : i32
    return %c0_i32, %c0_i32_0 : i32, i32
  }
  func.func @transform_8(%arg0: i32) -> (i32, i32) {
    %c0_i32 = arith.constant 0 : i32
    %c0_i32_0 = arith.constant 0 : i32
    %c0_i32_1 = arith.constant 0 : i32
    return %c0_i32, %c0_i32_0 : i32, i32
  }
  func.func @transform_9(%arg0: i32) -> (i32, i32) {
    %c0_i32 = arith.constant 0 : i32
    %c0_i32_0 = arith.constant 0 : i32
    return %arg0, %c0_i32 : i32, i32
  }
  func.func @transform_10(%arg0: i32) -> (i32, i32) {
    %c0_i32 = arith.constant 0 : i32
    %c0_i32_0 = arith.constant 0 : i32
    return %arg0, %c0_i32 : i32, i32
  }
}

</mosaic_0001>

<llo_original>
// kernel: tpu_custom_call.1
$region0: #{tpu_custom_call.1}
  #allocation0 [shape = 'u32[]', space=smem, size = 0x4, offset = 0x4, fixed_abs, tag = 'smem constant byte address 0x4 - core index']
  #allocation1 [shape = 'u32[144,128]{1,0:T(1,128)}', space=vmem, size = 0x12000, scoped, tag = 'internal scratch']
  %s0 = inlined_call_operand.vmem [shape: f32[32,6], index: 0, kind: input, shape index: {}]
  %s1 = inlined_call_operand.vmem [shape: f32[32,32], index: 1, kind: input, shape index: {}]
  %s2 = inlined_call_operand.vmem [shape: bf16[4,32,32], index: 2, kind: input, shape index: {}]
  %s3 = inlined_call_operand.vmem [shape: f32[4,32,6], index: 3, kind: input, shape index: {}]
  %s4 = inlined_call_operand.vmem [shape: f32[4,32,1], index: 4, kind: input, shape index: {}]
  %s5 = inlined_call_operand.vmem [shape: bf16[8,32,32], index: 5, kind: input, shape index: {}]
  %s6 = inlined_call_operand.vmem [shape: bf16[2,32], index: 6, kind: input, shape index: {}]
  %s7 = inlined_call_operand.vmem [shape: bf16[32,2], index: 7, kind: input, shape index: {}]
  %s8 = inlined_call_operand.vmem [shape: f32[8,32], index: 8, kind: input, shape index: {}]
  %s9 = inlined_call_operand.vmem [shape: f32[32,6], index: 9, kind: output, shape index: {0}]
  %s10 = inlined_call_operand.hbm [shape: f32[32,32], index: 10, kind: output, shape index: {1}]
  %11 = xla_tuple %s9, %s10
  %s12 = sld [smem:[#allocation0]]
  $region54: #{tpu_custom_call.1} parent=0
    _
  %s14 = ssub.s32 1, %s12
  %s15 = scalar_select 0, %s14, %s12
  $region1: #{tpu_custom_call.1} parent=0
    #allocation2 [shape = 'u8[16384]{0}', space=vmem, size = 0x4000, scoped, tag = 'output window, operand 1, single buffered']
    #allocation3 [shape = 's32[1]{0}', space=sflag, size = 0x4, scoped, tag = 'scoped memory for tpu_custom_call.1']
    %16 = vsyncpa [#allocation3], 0
    // Predicated region
    $region2: #{tpu_custom_call.1} parent=1 // pred_check
      _
    $region3: #{tpu_custom_call.1} parent=1 // pred_check_branch
      %18 = sbr.rel (0) target = $region5
    $region4: #{tpu_custom_call.1} parent=1 // pred_region
      _
    $region5: #{tpu_custom_call.1} parent=1 // pred_fallthru
      _
    // Predicated region
    $region6: #{tpu_custom_call.1} parent=1 // pred_check
      _
    $region7: #{tpu_custom_call.1} parent=1 // pred_check_branch
      %20 = sbr.rel (0) target = $region9
    $region8: #{tpu_custom_call.1} parent=1 // pred_region
      _
    $region9: #{tpu_custom_call.1} parent=1 // pred_fallthru
      _
    // Predicated region
    $region10: #{tpu_custom_call.1} parent=1 // pred_check
      _
    $region11: #{tpu_custom_call.1} parent=1 // pred_check_branch
      %22 = sbr.rel (0) target = $region13
    $region12: #{tpu_custom_call.1} parent=1 // pred_region
      _
    $region13: #{tpu_custom_call.1} parent=1 // pred_fallthru
      _
    // Predicated region
    $region14: #{tpu_custom_call.1} parent=1 // pred_check
      _
    $region15: #{tpu_custom_call.1} parent=1 // pred_check_branch
      %24 = sbr.rel (0) target = $region17
    $region16: #{tpu_custom_call.1} parent=1 // pred_region
      _
    $region17: #{tpu_custom_call.1} parent=1 // pred_fallthru
      _
    // Predicated region
    $region18: #{tpu_custom_call.1} parent=1 // pred_check
      _
    $region19: #{tpu_custom_call.1} parent=1 // pred_check_branch
      %26 = sbr.rel (0) target = $region21
    $region20: #{tpu_custom_call.1} parent=1 // pred_region
      _
    $region21: #{tpu_custom_call.1} parent=1 // pred_fallthru
      _
    // Predicated region
    $region22: #{tpu_custom_call.1} parent=1 // pred_check
      _
    $region23: #{tpu_custom_call.1} parent=1 // pred_check_branch
      %28 = sbr.rel (0) target = $region25
    $region24: #{tpu_custom_call.1} parent=1 // pred_region
      _
    $region25: #{tpu_custom_call.1} parent=1 // pred_fallthru
      _
    // Predicated region
    $region26: #{tpu_custom_call.1} parent=1 // pred_check
      _
    $region27: #{tpu_custom_call.1} parent=1 // pred_check_branch
      %30 = sbr.rel (0) target = $region29
    $region28: #{tpu_custom_call.1} parent=1 // pred_region
      _
    $region29: #{tpu_custom_call.1} parent=1 // pred_fallthru
      _
    // Predicated region
    $region30: #{tpu_custom_call.1} parent=1 // pred_check
      _
    $region31: #{tpu_custom_call.1} parent=1 // pred_check_branch
      %32 = sbr.rel (0) target = $region33
    $region32: #{tpu_custom_call.1} parent=1 // pred_region
      _
    $region33: #{tpu_custom_call.1} parent=1 // pred_fallthru
      _
    // Predicated region
    $region34: #{tpu_custom_call.1} parent=1 // pred_check
      _
    $region35: #{tpu_custom_call.1} parent=1 // pred_check_branch
      %34 = sbr.rel (0) target = $region37
    $region36: #{tpu_custom_call.1} parent=1 // pred_region
      _
    $region37: #{tpu_custom_call.1} parent=1 // pred_fallthru
      _
    %v36 = vld [vmem:[%s0] sm:$0xff]
    %v37 = vld [vmem:[%s0 + $0x8] sm:$0xff]
    %v38 = vld [vmem:[%s0 + $0x10] sm:$0xff]
    %v39 = vld [vmem:[%s0 + $0x18] sm:$0xff]
    %v40 = vld [vmem:[%s1] sm:$0xff]
    %v41 = vld [vmem:[%s1 + $0x8] sm:$0xff]
    %v42 = vld [vmem:[%s1 + $0x10] sm:$0xff]
    %v43 = vld [vmem:[%s1 + $0x18] sm:$0xff]
    %v44 = vld [vmem:[%s2] sm:$0xf]
    %v45 = vld [vmem:[%s2 + $0x4] sm:$0xf]
    %v46 = vld [vmem:[%s2 + $0x8] sm:$0xf]
    %v47 = vld [vmem:[%s2 + $0xc] sm:$0xf]
    %v48 = vld [vmem:[%s2 + $0x10] sm:$0xf]
    %v49 = vld [vmem:[%s2 + $0x14] sm:$0xf]
    %v50 = vld [vmem:[%s2 + $0x18] sm:$0xf]
    %v51 = vld [vmem:[%s2 + $0x1c] sm:$0xf]
    %v52 = vld [vmem:[%s2 + $0x20] sm:$0xf]
    %v53 = vld [vmem:[%s2 + $0x24] sm:$0xf]
    %v54 = vld [vmem:[%s2 + $0x28] sm:$0xf]
    %v55 = vld [vmem:[%s2 + $0x2c] sm:$0xf]
    %v56 = vld [vmem:[%s2 + $0x30] sm:$0xf]
    %v57 = vld [vmem:[%s2 + $0x34] sm:$0xf]
    %v58 = vld [vmem:[%s2 + $0x38] sm:$0xf]
    %v59 = vld [vmem:[%s2 + $0x3c] sm:$0xf]
    %v60 = vld [vmem:[%s3] sm:$0xff]
    %v61 = vld [vmem:[%s3 + $0x8] sm:$0xff]
    %v62 = vld [vmem:[%s3 + $0x10] sm:$0xff]
    %v63 = vld [vmem:[%s3 + $0x18] sm:$0xff]
    %v64 = vld [vmem:[%s3 + $0x20] sm:$0xff]
    %v65 = vld [vmem:[%s3 + $0x28] sm:$0xff]
    %v66 = vld [vmem:[%s3 + $0x30] sm:$0xff]
    %v67 = vld [vmem:[%s3 + $0x38] sm:$0xff]
    %v68 = vld [vmem:[%s3 + $0x40] sm:$0xff]
    %v69 = vld [vmem:[%s3 + $0x48] sm:$0xff]
    %v70 = vld [vmem:[%s3 + $0x50] sm:$0xff]
    %v71 = vld [vmem:[%s3 + $0x58] sm:$0xff]
    %v72 = vld [vmem:[%s3 + $0x60] sm:$0xff]
    %v73 = vld [vmem:[%s3 + $0x68] sm:$0xff]
    %v74 = vld [vmem:[%s3 + $0x70] sm:$0xff]
    %v75 = vld [vmem:[%s3 + $0x78] sm:$0xff]
    %v76 = vld [vmem:[%s4] sm:$0xff]
    %v77 = vld [vmem:[%s4 + $0x8] sm:$0xff]
    %v78 = vld [vmem:[%s4 + $0x10] sm:$0xff]
    %v79 = vld [vmem:[%s4 + $0x18] sm:$0xff]
    %v80 = vld [vmem:[%s4 + $0x20] sm:$0xff]
    %v81 = vld [vmem:[%s4 + $0x28] sm:$0xff]
    %v82 = vld [vmem:[%s4 + $0x30] sm:$0xff]
    %v83 = vld [vmem:[%s4 + $0x38] sm:$0xff]
    %v84 = vld [vmem:[%s4 + $0x40] sm:$0xff]
    %v85 = vld [vmem:[%s4 + $0x48] sm:$0xff]
    %v86 = vld [vmem:[%s4 + $0x50] sm:$0xff]
    %v87 = vld [vmem:[%s4 + $0x58] sm:$0xff]
    %v88 = vld [vmem:[%s4 + $0x60] sm:$0xff]
    %v89 = vld [vmem:[%s4 + $0x68] sm:$0xff]
    %v90 = vld [vmem:[%s4 + $0x70] sm:$0xff]
    %v91 = vld [vmem:[%s4 + $0x78] sm:$0xff]
    %v92 = vld [vmem:[%s5] sm:$0xf]
    %v93 = vld [vmem:[%s5 + $0x4] sm:$0xf]
    %v94 = vld [vmem:[%s5 + $0x8] sm:$0xf]
    %v95 = vld [vmem:[%s5 + $0xc] sm:$0xf]
    %s96 = scalar_lea.vmem %s5, 16
    %v97 = vld [vmem:[%s96] sm:$0xf]
    %v98 = vld [vmem:[%s96 + $0x4] sm:$0xf]
    %v99 = vld [vmem:[%s96 + $0x8] sm:$0xf]
    %v100 = vld [vmem:[%s96 + $0xc] sm:$0xf]
    %s101 = scalar_lea.vmem %s5, 32
    %v102 = vld [vmem:[%s101] sm:$0xf]
    %v103 = vld [vmem:[%s101 + $0x4] sm:$0xf]
    %v104 = vld [vmem:[%s101 + $0x8] sm:$0xf]
    %v105 = vld [vmem:[%s101 + $0xc] sm:$0xf]
    %s106 = scalar_lea.vmem %s5, 48
    %v107 = vld [vmem:[%s106] sm:$0xf]
    %v108 = vld [vmem:[%s106 + $0x4] sm:$0xf]
    %v109 = vld [vmem:[%s106 + $0x8] sm:$0xf]
    %v110 = vld [vmem:[%s106 + $0xc] sm:$0xf]
    %s111 = scalar_lea.vmem %s5, 64
    %v112 = vld [vmem:[%s111] sm:$0xf]
    %v113 = vld [vmem:[%s111 + $0x4] sm:$0xf]
    %v114 = vld [vmem:[%s111 + $0x8] sm:$0xf]
    %v115 = vld [vmem:[%s111 + $0xc] sm:$0xf]
    %s116 = scalar_lea.vmem %s5, 80
    %v117 = vld [vmem:[%s116] sm:$0xf]
    %v118 = vld [vmem:[%s116 + $0x4] sm:$0xf]
    %v119 = vld [vmem:[%s116 + $0x8] sm:$0xf]
    %v120 = vld [vmem:[%s116 + $0xc] sm:$0xf]
    %s121 = scalar_lea.vmem %s5, 96
    %v122 = vld [vmem:[%s121] sm:$0xf]
    %v123 = vld [vmem:[%s121 + $0x4] sm:$0xf]
    %v124 = vld [vmem:[%s121 + $0x8] sm:$0xf]
    %v125 = vld [vmem:[%s121 + $0xc] sm:$0xf]
    %s126 = scalar_lea.vmem %s5, 112
    %v127 = vld [vmem:[%s126] sm:$0xf]
    %v128 = vld [vmem:[%s126 + $0x4] sm:$0xf]
    %v129 = vld [vmem:[%s126 + $0x8] sm:$0xf]
    %v130 = vld [vmem:[%s126 + $0xc] sm:$0xf]
    %v131 = vld [vmem:[%s6] sm:$0x1]
    %v132 = vld [vmem:[%s7] sm:$0xf]
    %v133 = vld [vmem:[%s7 + $0x4] sm:$0xf]
    %v134 = vld [vmem:[%s7 + $0x8] sm:$0xf]
    %v135 = vld [vmem:[%s7 + $0xc] sm:$0xf]
    %v136 = vld [vmem:[%s8] sm:$0x1]
    %v137 = vld [vmem:[%s8 + $0x1] sm:$0x1]
    %v138 = vld [vmem:[%s8 + $0x2] sm:$0x1]
    %v139 = vld [vmem:[%s8 + $0x3] sm:$0x1]
    %v140 = vld [vmem:[%s8 + $0x4] sm:$0x1]
    %v141 = vld [vmem:[%s8 + $0x5] sm:$0x1]
    %v142 = vld [vmem:[%s8 + $0x6] sm:$0x1]
    %v143 = vld [vmem:[%s8 + $0x7] sm:$0x1]
    %v144 = vmul.f32 %v60, %v60
    %v145 = vmul.f32 %v61, %v61
    %v146 = vmul.f32 %v62, %v62
    %v147 = vmul.f32 %v63, %v63
    %v148 = vmul.f32 %v64, %v64
    %v149 = vmul.f32 %v65, %v65
    %v150 = vmul.f32 %v66, %v66
    %v151 = vmul.f32 %v67, %v67
    %v152 = vmul.f32 %v68, %v68
    %v153 = vmul.f32 %v69, %v69
    %v154 = vmul.f32 %v70, %v70
    %v155 = vmul.f32 %v71, %v71
    %v156 = vmul.f32 %v72, %v72
    %v157 = vmul.f32 %v73, %v73
    %v158 = vmul.f32 %v74, %v74
    %v159 = vmul.f32 %v75, %v75
    %176 = vrot.lane.b32.xlu0 %v144, 127
    %v177 = vpop.permute.xlu0 %176
    %178 = vrot.lane.b32.xlu0 %v145, 127
    %v179 = vpop.permute.xlu0 %178
    %180 = vrot.lane.b32.xlu0 %v146, 127
    %v181 = vpop.permute.xlu0 %180
    %182 = vrot.lane.b32.xlu0 %v147, 127
    %v183 = vpop.permute.xlu0 %182
    %184 = vrot.lane.b32.xlu0 %v148, 127
    %v185 = vpop.permute.xlu0 %184
    %186 = vrot.lane.b32.xlu0 %v149, 127
    %v187 = vpop.permute.xlu0 %186
    %188 = vrot.lane.b32.xlu0 %v150, 127
    %v189 = vpop.permute.xlu0 %188
    %190 = vrot.lane.b32.xlu0 %v151, 127
    %v191 = vpop.permute.xlu0 %190
    %192 = vrot.lane.b32.xlu0 %v152, 127
    %v193 = vpop.permute.xlu0 %192
    %194 = vrot.lane.b32.xlu0 %v153, 127
    %v195 = vpop.permute.xlu0 %194
    %196 = vrot.lane.b32.xlu0 %v154, 127
    %v197 = vpop.permute.xlu0 %196
    %198 = vrot.lane.b32.xlu0 %v155, 127
    %v199 = vpop.permute.xlu0 %198
    %200 = vrot.lane.b32.xlu0 %v156, 127
    %v201 = vpop.permute.xlu0 %200
    %202 = vrot.lane.b32.xlu0 %v157, 127
    %v203 = vpop.permute.xlu0 %202
    %204 = vrot.lane.b32.xlu0 %v158, 127
    %v205 = vpop.permute.xlu0 %204
    %206 = vrot.lane.b32.xlu0 %v159, 127
    %v207 = vpop.permute.xlu0 %206
    %v224 = vadd.f32 %v144, %v177
    %v225 = vadd.f32 %v145, %v179
    %v226 = vadd.f32 %v146, %v181
    %v227 = vadd.f32 %v147, %v183
    %v228 = vadd.f32 %v148, %v185
    %v229 = vadd.f32 %v149, %v187
    %v230 = vadd.f32 %v150, %v189
    %v231 = vadd.f32 %v151, %v191
    %v232 = vadd.f32 %v152, %v193
    %v233 = vadd.f32 %v153, %v195
    %v234 = vadd.f32 %v154, %v197
    %v235 = vadd.f32 %v155, %v199
    %v236 = vadd.f32 %v156, %v201
    %v237 = vadd.f32 %v157, %v203
    %v238 = vadd.f32 %v158, %v205
    %v239 = vadd.f32 %v159, %v207
    %v240 = vrsqrt.pop %v224
    %v241 = vmul.f32 %v224, %v240
    %vm242 = vcmp.eq.f32.partialorder %v224, inf
    %v243 = vsel %vm242, %v224, %v241
    %vm244 = vcmp.eq.f32.partialorder %v224, 0.0
    %v245 = vand.u32 %v224, 2147483648
    %v246 = vsel %vm244, %v245, %v243
    %v247 = vrsqrt.pop %v225
    %v248 = vmul.f32 %v225, %v247
    %vm249 = vcmp.eq.f32.partialorder %v225, inf
    %v250 = vsel %vm249, %v225, %v248
    %vm251 = vcmp.eq.f32.partialorder %v225, 0.0
    %v252 = vand.u32 %v225, 2147483648
    %v253 = vsel %vm251, %v252, %v250
    %v254 = vrsqrt.pop %v226
    %v255 = vmul.f32 %v226, %v254
    %vm256 = vcmp.eq.f32.partialorder %v226, inf
    %v257 = vsel %vm256, %v226, %v255
    %vm258 = vcmp.eq.f32.partialorder %v226, 0.0
    %v259 = vand.u32 %v226, 2147483648
    %v260 = vsel %vm258, %v259, %v257
    %v261 = vrsqrt.pop %v227
    %v262 = vmul.f32 %v227, %v261
    %vm263 = vcmp.eq.f32.partialorder %v227, inf
    %v264 = vsel %vm263, %v227, %v262
    %vm265 = vcmp.eq.f32.partialorder %v227, 0.0
    %v266 = vand.u32 %v227, 2147483648
    %v267 = vsel %vm265, %v266, %v264
    %v268 = vrsqrt.pop %v228
    %v269 = vmul.f32 %v228, %v268
    %vm270 = vcmp.eq.f32.partialorder %v228, inf
    %v271 = vsel %vm270, %v228, %v269
    %vm272 = vcmp.eq.f32.partialorder %v228, 0.0
    %v273 = vand.u32 %v228, 2147483648
    %v274 = vsel %vm272, %v273, %v271
    %v275 = vrsqrt.pop %v229
    %v276 = vmul.f32 %v229, %v275
    %vm277 = vcmp.eq.f32.partialorder %v229, inf
    %v278 = vsel %vm277, %v229, %v276
    %vm279 = vcmp.eq.f32.partialorder %v229, 0.0
    %v280 = vand.u32 %v229, 2147483648
    %v281 = vsel %vm279, %v280, %v278
    %v282 = vrsqrt.pop %v230
    %v283 = vmul.f32 %v230, %v282
    %vm284 = vcmp.eq.f32.partialorder %v230, inf
    %v285 = vsel %vm284, %v230, %v283
    %vm286 = vcmp.eq.f32.partialorder %v230, 0.0
    %v287 = vand.u32 %v230, 2147483648
    %v288 = vsel %vm286, %v287, %v285
    %v289 = vrsqrt.pop %v231
    %v290 = vmul.f32 %v231, %v289
    %vm291 = vcmp.eq.f32.partialorder %v231, inf
    %v292 = vsel %vm291, %v231, %v290
    %vm293 = vcmp.eq.f32.partialorder %v231, 0.0
    %v294 = vand.u32 %v231, 2147483648
    %v295 = vsel %vm293, %v294, %v292
    %v296 = vrsqrt.pop %v232
    %v297 = vmul.f32 %v232, %v296
    %vm298 = vcmp.eq.f32.partialorder %v232, inf
    %v299 = vsel %vm298, %v232, %v297
    %vm300 = vcmp.eq.f32.partialorder %v232, 0.0
    %v301 = vand.u32 %v232, 2147483648
    %v302 = vsel %vm300, %v301, %v299
    %v303 = vrsqrt.pop %v233
    %v304 = vmul.f32 %v233, %v303
    %vm305 = vcmp.eq.f32.partialorder %v233, inf
    %v306 = vsel %vm305, %v233, %v304
    %vm307 = vcmp.eq.f32.partialorder %v233, 0.0
    %v308 = vand.u32 %v233, 2147483648
    %v309 = vsel %vm307, %v308, %v306
    %v310 = vrsqrt.pop %v234
    %v311 = vmul.f32 %v234, %v310
    %vm312 = vcmp.eq.f32.partialorder %v234, inf
    %v313 = vsel %vm312, %v234, %v311
    %vm314 = vcmp.eq.f32.partialorder %v234, 0.0
    %v315 = vand.u32 %v234, 2147483648
    %v316 = vsel %vm314, %v315, %v313
    %v317 = vrsqrt.pop %v235
    %v318 = vmul.f32 %v235, %v317
    %vm319 = vcmp.eq.f32.partialorder %v235, inf
    %v320 = vsel %vm319, %v235, %v318
    %vm321 = vcmp.eq.f32.partialorder %v235, 0.0
    %v322 = vand.u32 %v235, 2147483648
    %v323 = vsel %vm321, %v322, %v320
    %v324 = vrsqrt.pop %v236
    %v325 = vmul.f32 %v236, %v324
    %vm326 = vcmp.eq.f32.partialorder %v236, inf
    %v327 = vsel %vm326, %v236, %v325
    %vm328 = vcmp.eq.f32.partialorder %v236, 0.0
    %v329 = vand.u32 %v236, 2147483648
    %v330 = vsel %vm328, %v329, %v327
    %v331 = vrsqrt.pop %v237
    %v332 = vmul.f32 %v237, %v331
    %vm333 = vcmp.eq.f32.partialorder %v237, inf
    %v334 = vsel %vm333, %v237, %v332
    %vm335 = vcmp.eq.f32.partialorder %v237, 0.0
    %v336 = vand.u32 %v237, 2147483648
    %v337 = vsel %vm335, %v336, %v334
    %v338 = vrsqrt.pop %v238
    %v339 = vmul.f32 %v238, %v338
    %vm340 = vcmp.eq.f32.partialorder %v238, inf
    %v341 = vsel %vm340, %v238, %v339
    %vm342 = vcmp.eq.f32.partialorder %v238, 0.0
    %v343 = vand.u32 %v238, 2147483648
    %v344 = vsel %vm342, %v343, %v341
    %v345 = vrsqrt.pop %v239
    %v346 = vmul.f32 %v239, %v345
    %vm347 = vcmp.eq.f32.partialorder %v239, inf
    %v348 = vsel %vm347, %v239, %v346
    %vm349 = vcmp.eq.f32.partialorder %v239, 0.0
    %v350 = vand.u32 %v239, 2147483648
    %v351 = vsel %vm349, %v350, %v348
    %368 = vrot.lane.b32.xlu0 %v246, 127
    %v369 = vpop.permute.xlu0 %368
    %370 = vrot.lane.b32.xlu0 %v253, 127
    %v371 = vpop.permute.xlu0 %370
    %372 = vrot.lane.b32.xlu0 %v260, 127
    %v373 = vpop.permute.xlu0 %372
    %374 = vrot.lane.b32.xlu0 %v267, 127
    %v375 = vpop.permute.xlu0 %374
    %376 = vrot.lane.b32.xlu0 %v274, 127
    %v377 = vpop.permute.xlu0 %376
    %378 = vrot.lane.b32.xlu0 %v281, 127
    %v379 = vpop.permute.xlu0 %378
    %380 = vrot.lane.b32.xlu0 %v288, 127
    %v381 = vpop.permute.xlu0 %380
    %382 = vrot.lane.b32.xlu0 %v295, 127
    %v383 = vpop.permute.xlu0 %382
    %384 = vrot.lane.b32.xlu0 %v302, 127
    %v385 = vpop.permute.xlu0 %384
    %386 = vrot.lane.b32.xlu0 %v309, 127
    %v387 = vpop.permute.xlu0 %386
    %388 = vrot.lane.b32.xlu0 %v316, 127
    %v389 = vpop.permute.xlu0 %388
    %390 = vrot.lane.b32.xlu0 %v323, 127
    %v391 = vpop.permute.xlu0 %390
    %392 = vrot.lane.b32.xlu0 %v330, 127
    %v393 = vpop.permute.xlu0 %392
    %394 = vrot.lane.b32.xlu0 %v337, 127
    %v395 = vpop.permute.xlu0 %394
    %396 = vrot.lane.b32.xlu0 %v344, 127
    %v397 = vpop.permute.xlu0 %396
    %398 = vrot.lane.b32.xlu0 %v351, 127
    %v399 = vpop.permute.xlu0 %398
    %vm416 = vcmask 7168
    %v417 = vsel %vm416, %v246, %v369
    %v418 = vsel %vm416, %v253, %v371
    %v419 = vsel %vm416, %v260, %v373
    %v420 = vsel %vm416, %v267, %v375
    %v421 = vsel %vm416, %v274, %v377
    %v422 = vsel %vm416, %v281, %v379
    %v423 = vsel %vm416, %v288, %v381
    %v424 = vsel %vm416, %v295, %v383
    %v425 = vsel %vm416, %v302, %v385
    %v426 = vsel %vm416, %v309, %v387
    %v427 = vsel %vm416, %v316, %v389
    %v428 = vsel %vm416, %v323, %v391
    %v429 = vsel %vm416, %v330, %v393
    %v430 = vsel %vm416, %v337, %v395
    %v431 = vsel %vm416, %v344, %v397
    %v432 = vsel %vm416, %v351, %v399
    %v433 = vpack.c.bf16 %v41, %v40
    %v434 = vpack.c.bf16 %v43, %v42
    %v439 = vunpack.c.l.b16 %v92
    %v440 = vunpack.c.l.b16 %v93
    %v441 = vunpack.c.l.b16 %v94
    %v442 = vunpack.c.l.b16 %v95
    %v443 = vpack.c.b16 %v440, %v439
    %v444 = vpack.c.b16 %v442, %v441
    %vm447 = vcmask 261120
    %v449 = vsel %vm447, %v433, 0
    %v452 = vsel %vm447, %v434, 0
    %454 = vmatprep.subr.bf16.mxu0 0
    %455 = vmatpush1.bf16.msra.mxu0 %v443
    %456 = vmatprep.subr.bf16.mxu0 0
    %457 = vmatpush1.bf16.msra.mxu0 %v444
    %458 = vmatprep.subr.bf16.mxu0 0
    %459 = vmatpush1.bf16.msra.mxu0 0
    %460 = vmatprep.subr.bf16.mxu0 0
    %461 = vmatpush1.bf16.msra.mxu0 0
    %462 = vmatprep.subr.bf16.mxu0 0
    %463 = vmatpush1.bf16.msra.mxu0 0
    %464 = vmatprep.subr.bf16.mxu0 0
    %465 = vmatpush1.bf16.msra.mxu0 0
    %466 = vmatprep.subr.bf16.mxu0 0
    %467 = vmatpush1.bf16.msra.mxu0 0
    %468 = vmatprep.subr.bf16.mxu0 0
    %469 = vmatpush1.bf16.msra.mxu0 0
    %470 = vmatprep.subr.bf16.mxu0 0
    %471 = vmatpush1.bf16.msra.mxu0 0
    %472 = vmatprep.subr.bf16.mxu0 0
    %473 = vmatpush1.bf16.msra.mxu0 0
    %474 = vmatprep.subr.bf16.mxu0 0
    %475 = vmatpush1.bf16.msra.mxu0 0
    %476 = vmatprep.subr.bf16.mxu0 0
    %477 = vmatpush1.bf16.msra.mxu0 0
    %478 = vmatprep.subr.bf16.mxu0 0
    %479 = vmatpush1.bf16.msra.mxu0 0
    %480 = vmatprep.subr.bf16.mxu0 0
    %481 = vmatpush1.bf16.msra.mxu0 0
    %482 = vmatprep.subr.bf16.mxu0 0
    %483 = vmatpush1.bf16.msra.mxu0 0
    %484 = vmatprep.subr.bf16.mxu0 0
    %485 = vmatpush1.bf16.msra.mxu0 0
    %486 = vmatprep.mubr.bf16.mxu0 0
    %487 = vmatmul.mubr.bf16.gmra.mrb[0].mxu0 %v449
    %v488 = vpop.f32.mrb[0].mxu0
    %v489 = vadd.f32 0.0, %v488
    %v490 = vpop.f32.mrb[0].mxu0
    %v491 = vpop.f32.mrb[0].mxu0
    %v492 = vadd.f32 0.0, %v491
    %v493 = vpop.f32.mrb[0].mxu0
    %494 = vmatprep.mubr.bf16.mxu0 0
    %495 = vmatmul.mubr.bf16.gmra.mrb[0].mxu0 %v452
    %v496 = vpop.f32.mrb[0].mxu0
    %v497 = vadd.f32 0.0, %v496
    %v498 = vpop.f32.mrb[0].mxu0
    %v499 = vpop.f32.mrb[0].mxu0
    %v500 = vadd.f32 0.0, %v499
    %v501 = vpop.f32.mrb[0].mxu0
    %502 = vdwg.mxu0
    %v519 = vunpack.c.l.b16 %v44
    %v520 = vunpack.c.l.b16 %v45
    %v521 = vunpack.c.l.b16 %v46
    %v522 = vunpack.c.l.b16 %v47
    %v523 = vunpack.c.l.b16 %v48
    %v524 = vunpack.c.l.b16 %v49
    %v525 = vunpack.c.l.b16 %v50
    %v526 = vunpack.c.l.b16 %v51
    %v527 = vunpack.c.l.b16 %v52
    %v528 = vunpack.c.l.b16 %v53
    %v529 = vunpack.c.l.b16 %v54
    %v530 = vunpack.c.l.b16 %v55
    %v531 = vunpack.c.l.b16 %v56
    %v532 = vunpack.c.l.b16 %v57
    %v533 = vunpack.c.l.b16 %v58
    %v534 = vunpack.c.l.b16 %v59
    %v535 = vpack.c.b16 %v520, %v519
    %v536 = vpack.c.b16 %v522, %v521
    %v537 = vpack.c.b16 %v524, %v523
    %v538 = vpack.c.b16 %v526, %v525
    %v539 = vpack.c.b16 %v528, %v527
    %v540 = vpack.c.b16 %v530, %v529
    %v541 = vpack.c.b16 %v532, %v531
    %v542 = vpack.c.b16 %v534, %v533
    %v547 = vunpack.c.l.b16 %v97
    %v548 = vunpack.c.l.b16 %v98
    %v549 = vunpack.c.l.b16 %v99
    %v550 = vunpack.c.l.b16 %v100
    %v551 = vpack.c.b16 %v548, %v547
    %v552 = vpack.c.b16 %v550, %v549
    %v556 = vsel %vm447, %v535, 0
    %v559 = vsel %vm447, %v536, 0
    %v562 = vsel %vm447, %v537, 0
    %v565 = vsel %vm447, %v538, 0
    %v568 = vsel %vm447, %v539, 0
    %v571 = vsel %vm447, %v540, 0
    %v574 = vsel %vm447, %v541, 0
    %v577 = vsel %vm447, %v542, 0
    %579 = vmatprep.subr.bf16.mxu0 0
    %580 = vmatpush1.bf16.msra.mxu0 %v551
    %581 = vmatprep.subr.bf16.mxu0 0
    %582 = vmatpush1.bf16.msra.mxu0 %v552
    %583 = vmatprep.subr.bf16.mxu0 0
    %584 = vmatpush1.bf16.msra.mxu0 0
    %585 = vmatprep.subr.bf16.mxu0 0
    %586 = vmatpush1.bf16.msra.mxu0 0
    %587 = vmatprep.subr.bf16.mxu0 0
    %588 = vmatpush1.bf16.msra.mxu0 0
    %589 = vmatprep.subr.bf16.mxu0 0
    %590 = vmatpush1.bf16.msra.mxu0 0
    %591 = vmatprep.subr.bf16.mxu0 0
    %592 = vmatpush1.bf16.msra.mxu0 0
    %593 = vmatprep.subr.bf16.mxu0 0
    %594 = vmatpush1.bf16.msra.mxu0 0
    %595 = vmatprep.subr.bf16.mxu0 0
    %596 = vmatpush1.bf16.msra.mxu0 0
    %597 = vmatprep.subr.bf16.mxu0 0
    %598 = vmatpush1.bf16.msra.mxu0 0
    %599 = vmatprep.subr.bf16.mxu0 0
    %600 = vmatpush1.bf16.msra.mxu0 0
    %601 = vmatprep.subr.bf16.mxu0 0
    %602 = vmatpush1.bf16.msra.mxu0 0
    %603 = vmatprep.subr.bf16.mxu0 0
    %604 = vmatpush1.bf16.msra.mxu0 0
    %605 = vmatprep.subr.bf16.mxu0 0
    %606 = vmatpush1.bf16.msra.mxu0 0
    %607 = vmatprep.subr.bf16.mxu0 0
    %608 = vmatpush1.bf16.msra.mxu0 0
    %609 = vmatprep.subr.bf16.mxu0 0
    %610 = vmatpush1.bf16.msra.mxu0 0
    %611 = vmatprep.mubr.bf16.mxu0 0
    %612 = vmatmul.mubr.bf16.gmra.mrb[0].mxu0 %v556
    %v613 = vpop.f32.mrb[0].mxu0
    %v614 = vadd.f32 0.0, %v613
    %v615 = vpop.f32.mrb[0].mxu0
    %v616 = vpop.f32.mrb[0].mxu0
    %v617 = vadd.f32 0.0, %v616
    %v618 = vpop.f32.mrb[0].mxu0
    %619 = vmatprep.mubr.bf16.mxu0 0
    %620 = vmatmul.mubr.bf16.gmra.mrb[0].mxu0 %v559
    %v621 = vpop.f32.mrb[0].mxu0
    %v622 = vadd.f32 0.0, %v621
    %v623 = vpop.f32.mrb[0].mxu0
    %v624 = vpop.f32.mrb[0].mxu0
    %v625 = vadd.f32 0.0, %v624
    %v626 = vpop.f32.mrb[0].mxu0
    %627 = vmatprep.mubr.bf16.mxu0 0
    %628 = vmatmul.mubr.bf16.gmra.mrb[0].mxu0 %v562
    %v629 = vpop.f32.mrb[0].mxu0
    %v630 = vadd.f32 0.0, %v629
    %v631 = vpop.f32.mrb[0].mxu0
    %v632 = vpop.f32.mrb[0].mxu0
    %v633 = vadd.f32 0.0, %v632
    %v634 = vpop.f32.mrb[0].mxu0
    %635 = vmatprep.mubr.bf16.mxu0 0
    %636 = vmatmul.mubr.bf16.gmra.mrb[0].mxu0 %v565
    %v637 = vpop.f32.mrb[0].mxu0
    %v638 = vadd.f32 0.0, %v637
    %v639 = vpop.f32.mrb[0].mxu0
    %v640 = vpop.f32.mrb[0].mxu0
    %v641 = vadd.f32 0.0, %v640
    %v642 = vpop.f32.mrb[0].mxu0
    %643 = vmatprep.mubr.bf16.mxu0 0
    %644 = vmatmul.mubr.bf16.gmra.mrb[0].mxu0 %v568
    %v645 = vpop.f32.mrb[0].mxu0
    %v646 = vadd.f32 0.0, %v645
    %v647 = vpop.f32.mrb[0].mxu0
    %v648 = vpop.f32.mrb[0].mxu0
    %v649 = vadd.f32 0.0, %v648
    %v650 = vpop.f32.mrb[0].mxu0
    %651 = vmatprep.mubr.bf16.mxu0 0
    %652 = vmatmul.mubr.bf16.gmra.mrb[0].mxu0 %v571
    %v653 = vpop.f32.mrb[0].mxu0
    %v654 = vadd.f32 0.0, %v653
    %v655 = vpop.f32.mrb[0].mxu0
    %v656 = vpop.f32.mrb[0].mxu0
    %v657 = vadd.f32 0.0, %v656
    %v658 = vpop.f32.mrb[0].mxu0
    %659 = vmatprep.mubr.bf16.mxu0 0
    %660 = vmatmul.mubr.bf16.gmra.mrb[0].mxu0 %v574
    %v661 = vpop.f32.mrb[0].mxu0
    %v662 = vadd.f32 0.0, %v661
    %v663 = vpop.f32.mrb[0].mxu0
    %v664 = vpop.f32.mrb[0].mxu0
    %v665 = vadd.f32 0.0, %v664
    %v666 = vpop.f32.mrb[0].mxu0
    %667 = vmatprep.mubr.bf16.mxu0 0
    %668 = vmatmul.mubr.bf16.gmra.mrb[0].mxu0 %v577
    %v669 = vpop.f32.mrb[0].mxu0
    %v670 = vadd.f32 0.0, %v669
    %v671 = vpop.f32.mrb[0].mxu0
    %v672 = vpop.f32.mrb[0].mxu0
    %v673 = vadd.f32 0.0, %v672
    %v674 = vpop.f32.mrb[0].mxu0
    %675 = vdwg.mxu0
    %v676 = vadd.f32 %v489, %v614
    %v677 = vadd.f32 %v492, %v617
    %v678 = vadd.f32 %v497, %v622
    %v679 = vadd.f32 %v500, %v625
    %v680 = vadd.f32 %v489, %v630
    %v681 = vadd.f32 %v492, %v633
    %v682 = vadd.f32 %v497, %v638
    %v683 = vadd.f32 %v500, %v641
    %v684 = vadd.f32 %v489, %v646
    %v685 = vadd.f32 %v492, %v649
    %v686 = vadd.f32 %v497, %v654
    %v687 = vadd.f32 %v500, %v657
    %v688 = vadd.f32 %v489, %v662
    %v689 = vadd.f32 %v492, %v665
    %v690 = vadd.f32 %v497, %v670
    %v691 = vadd.f32 %v500, %v673
    %v692 = vpack.c.bf16 %v418, %v417
    %v693 = vpack.c.bf16 %v420, %v419
    %v694 = vpack.c.bf16 %v422, %v421
    %v695 = vpack.c.bf16 %v424, %v423
    %v696 = vpack.c.bf16 %v426, %v425
    %v697 = vpack.c.bf16 %v428, %v427
    %v698 = vpack.c.bf16 %v430, %v429
    %v699 = vpack.c.bf16 %v432, %v431
    %vm700 = vcmask 15360
    %v702 = vsel %vm700, %v692, 0
    %v705 = vsel %vm700, %v693, 0
    %v708 = vsel %vm700, %v694, 0
    %v711 = vsel %vm700, %v695, 0
    %v714 = vsel %vm700, %v696, 0
    %v717 = vsel %vm700, %v697, 0
    %v720 = vsel %vm700, %v698, 0
    %v723 = vsel %vm700, %v699, 0
    %vm725 = vcmask 1040384
    %v727 = vsel %vm725, %v131, 0
    %729 = vmatprep.subr.bf16.mxu0 0
    %730 = vmatpush1.bf16.msra.mxu0 %v727
    %731 = vmatprep.subr.bf16.mxu0 0
    %732 = vmatpush1.bf16.msra.mxu0 0
    %733 = vmatprep.subr.bf16.mxu0 0
    %734 = vmatpush1.bf16.msra.mxu0 0
    %735 = vmatprep.subr.bf16.mxu0 0
    %736 = vmatpush1.bf16.msra.mxu0 0
    %737 = vmatprep.subr.bf16.mxu0 0
    %738 = vmatpush1.bf16.msra.mxu0 0
    %739 = vmatprep.subr.bf16.mxu0 0
    %740 = vmatpush1.bf16.msra.mxu0 0
    %741 = vmatprep.subr.bf16.mxu0 0
    %742 = vmatpush1.bf16.msra.mxu0 0
    %743 = vmatprep.subr.bf16.mxu0 0
    %744 = vmatpush1.bf16.msra.mxu0 0
    %745 = vmatprep.subr.bf16.mxu0 0
    %746 = vmatpush1.bf16.msra.mxu0 0
    %747 = vmatprep.subr.bf16.mxu0 0
    %748 = vmatpush1.bf16.msra.mxu0 0
    %749 = vmatprep.subr.bf16.mxu0 0
    %750 = vmatpush1.bf16.msra.mxu0 0
    %751 = vmatprep.subr.bf16.mxu0 0
    %752 = vmatpush1.bf16.msra.mxu0 0
    %753 = vmatprep.subr.bf16.mxu0 0
    %754 = vmatpush1.bf16.msra.mxu0 0
    %755 = vmatprep.subr.bf16.mxu0 0
    %756 = vmatpush1.bf16.msra.mxu0 0
    %757 = vmatprep.subr.bf16.mxu0 0
    %758 = vmatpush1.bf16.msra.mxu0 0
    %759 = vmatprep.subr.bf16.mxu0 0
    %760 = vmatpush1.bf16.msra.mxu0 0
    %761 = vmatprep.mubr.bf16.mxu0 0
    %762 = vmatmul.mubr.bf16.gmra.mrb[0].mxu0 %v702
    %v763 = vpop.f32.mrb[0].mxu0
    %v764 = vadd.f32 0.0, %v763
    %v765 = vpop.f32.mrb[0].mxu0
    %v766 = vpop.f32.mrb[0].mxu0
    %v767 = vadd.f32 0.0, %v766
    %v768 = vpop.f32.mrb[0].mxu0
    %769 = vmatprep.mubr.bf16.mxu0 0
    %770 = vmatmul.mubr.bf16.gmra.mrb[0].mxu0 %v705
    %v771 = vpop.f32.mrb[0].mxu0
    %v772 = vadd.f32 0.0, %v771
    %v773 = vpop.f32.mrb[0].mxu0
    %v774 = vpop.f32.mrb[0].mxu0
    %v775 = vadd.f32 0.0, %v774
    %v776 = vpop.f32.mrb[0].mxu0
    %777 = vmatprep.mubr.bf16.mxu0 0
    %778 = vmatmul.mubr.bf16.gmra.mrb[0].mxu0 %v708
    %v779 = vpop.f32.mrb[0].mxu0
    %v780 = vadd.f32 0.0, %v779
    %v781 = vpop.f32.mrb[0].mxu0
    %v782 = vpop.f32.mrb[0].mxu0
    %v783 = vadd.f32 0.0, %v782
    %v784 = vpop.f32.mrb[0].mxu0
    %785 = vmatprep.mubr.bf16.mxu0 0
    %786 = vmatmul.mubr.bf16.gmra.mrb[0].mxu0 %v711
    %v787 = vpop.f32.mrb[0].mxu0
    %v788 = vadd.f32 0.0, %v787
    %v789 = vpop.f32.mrb[0].mxu0
    %v790 = vpop.f32.mrb[0].mxu0
    %v791 = vadd.f32 0.0, %v790
    %v792 = vpop.f32.mrb[0].mxu0
    %793 = vmatprep.mubr.bf16.mxu0 0
    %794 = vmatmul.mubr.bf16.gmra.mrb[0].mxu0 %v714
    %v795 = vpop.f32.mrb[0].mxu0
    %v796 = vadd.f32 0.0, %v795
    %v797 = vpop.f32.mrb[0].mxu0
    %v798 = vpop.f32.mrb[0].mxu0
    %v799 = vadd.f32 0.0, %v798
    %v800 = vpop.f32.mrb[0].mxu0
    %801 = vmatprep.mubr.bf16.mxu0 0
    %802 = vmatmul.mubr.bf16.gmra.mrb[0].mxu0 %v717
    %v803 = vpop.f32.mrb[0].mxu0
    %v804 = vadd.f32 0.0, %v803
    %v805 = vpop.f32.mrb[0].mxu0
    %v806 = vpop.f32.mrb[0].mxu0
    %v807 = vadd.f32 0.0, %v806
    %v808 = vpop.f32.mrb[0].mxu0
    %809 = vmatprep.mubr.bf16.mxu0 0
    %810 = vmatmul.mubr.bf16.gmra.mrb[0].mxu0 %v720
    %v811 = vpop.f32.mrb[0].mxu0
    %v812 = vadd.f32 0.0, %v811
    %v813 = vpop.f32.mrb[0].mxu0
    %v814 = vpop.f32.mrb[0].mxu0
    %v815 = vadd.f32 0.0, %v814
    %v816 = vpop.f32.mrb[0].mxu0
    %817 = vmatprep.mubr.bf16.mxu0 0
    %818 = vmatmul.mubr.bf16.gmra.mrb[0].mxu0 %v723
    %v819 = vpop.f32.mrb[0].mxu0
    %v820 = vadd.f32 0.0, %v819
    %v821 = vpop.f32.mrb[0].mxu0
    %v822 = vpop.f32.mrb[0].mxu0
    %v823 = vadd.f32 0.0, %v822
    %v824 = vpop.f32.mrb[0].mxu0
    %825 = vdwg.mxu0
    %v826 = vadd.f32 %v676, %v764
    %v827 = vadd.f32 %v677, %v767
    %v828 = vadd.f32 %v678, %v772
    %v829 = vadd.f32 %v679, %v775
    %v830 = vadd.f32 %v680, %v780
    %v831 = vadd.f32 %v681, %v783
    %v832 = vadd.f32 %v682, %v788
    %v833 = vadd.f32 %v683, %v791
    %v834 = vadd.f32 %v684, %v796
    %v835 = vadd.f32 %v685, %v799
    %v836 = vadd.f32 %v686, %v804
    %v837 = vadd.f32 %v687, %v807
    %v838 = vadd.f32 %v688, %v812
    %v839 = vadd.f32 %v689, %v815
    %v840 = vadd.f32 %v690, %v820
    %v841 = vadd.f32 %v691, %v823
    %v842 = vlaneseq
    %v843 = vshrl.u32 %v842, 7
    %v844 = vsub.s32 0, %v843
    %v845 = vrot.slane %v136, %v844
    %v846 = vadd.f32 %v826, %v845
    %v847 = vadd.f32 %v827, %v845
    %v848 = vadd.f32 %v828, %v845
    %v849 = vadd.f32 %v829, %v845
    %v850 = vadd.f32 %v830, %v845
    %v851 = vadd.f32 %v831, %v845
    %v852 = vadd.f32 %v832, %v845
    %v853 = vadd.f32 %v833, %v845
    %v854 = vadd.f32 %v834, %v845
    %v855 = vadd.f32 %v835, %v845
    %v856 = vadd.f32 %v836, %v845
    %v857 = vadd.f32 %v837, %v845
    %v858 = vadd.f32 %v838, %v845
    %v859 = vadd.f32 %v839, %v845
    %v860 = vadd.f32 %v840, %v845
    %v861 = vadd.f32 %v841, %v845
    %v862 = vsub.f32 0.0, %v846
    %v863 = vsub.f32 0.0, %v847
    %v864 = vsub.f32 0.0, %v848
    %v865 = vsub.f32 0.0, %v849
    %v866 = vsub.f32 0.0, %v850
    %v867 = vsub.f32 0.0, %v851
    %v868 = vsub.f32 0.0, %v852
    %v869 = vsub.f32 0.0, %v853
    %v870 = vsub.f32 0.0, %v854
    %v871 = vsub.f32 0.0, %v855
    %v872 = vsub.f32 0.0, %v856
    %v873 = vsub.f32 0.0, %v857
    %v874 = vsub.f32 0.0, %v858
    %v875 = vsub.f32 0.0, %v859
    %v876 = vsub.f32 0.0, %v860
    %v877 = vsub.f32 0.0, %v861
    %v878 = vmul.f32 %v862, 1.442695
    %v879 = vpow.pop %v878
    %v880 = vmul.f32 %v863, 1.442695
    %v881 = vpow.pop %v880
    %v882 = vmul.f32 %v864, 1.442695
    %v883 = vpow.pop %v882
    %v884 = vmul.f32 %v865, 1.442695
    %v885 = vpow.pop %v884
    %v886 = vmul.f32 %v866, 1.442695
    %v887 = vpow.pop %v886
    %v888 = vmul.f32 %v867, 1.442695
    %v889 = vpow.pop %v888
    %v890 = vmul.f32 %v868, 1.442695
    %v891 = vpow.pop %v890
    %v892 = vmul.f32 %v869, 1.442695
    %v893 = vpow.pop %v892
    %v894 = vmul.f32 %v870, 1.442695
    %v895 = vpow.pop %v894
    %v896 = vmul.f32 %v871, 1.442695
    %v897 = vpow.pop %v896
    %v898 = vmul.f32 %v872, 1.442695
    %v899 = vpow.pop %v898
    %v900 = vmul.f32 %v873, 1.442695
    %v901 = vpow.pop %v900
    %v902 = vmul.f32 %v874, 1.442695
    %v903 = vpow.pop %v902
    %v904 = vmul.f32 %v875, 1.442695
    %v905 = vpow.pop %v904
    %v906 = vmul.f32 %v876, 1.442695
    %v907 = vpow.pop %v906
    %v908 = vmul.f32 %v877, 1.442695
    %v909 = vpow.pop %v908
    %v910 = vadd.f32 %v879, 1.0
    %v911 = vadd.f32 %v881, 1.0
    %v912 = vadd.f32 %v883, 1.0
    %v913 = vadd.f32 %v885, 1.0
    %v914 = vadd.f32 %v887, 1.0
    %v915 = vadd.f32 %v889, 1.0
    %v916 = vadd.f32 %v891, 1.0
    %v917 = vadd.f32 %v893, 1.0
    %v918 = vadd.f32 %v895, 1.0
    %v919 = vadd.f32 %v897, 1.0
    %v920 = vadd.f32 %v899, 1.0
    %v921 = vadd.f32 %v901, 1.0
    %v922 = vadd.f32 %v903, 1.0
    %v923 = vadd.f32 %v905, 1.0
    %v924 = vadd.f32 %v907, 1.0
    %v925 = vadd.f32 %v909, 1.0
    %v926 = vrcp.pop %v910
    %v927 = vrcp.pop %v911
    %v928 = vrcp.pop %v912
    %v929 = vrcp.pop %v913
    %v930 = vrcp.pop %v914
    %v931 = vrcp.pop %v915
    %v932 = vrcp.pop %v916
    %v933 = vrcp.pop %v917
    %v934 = vrcp.pop %v918
    %v935 = vrcp.pop %v919
    %v936 = vrcp.pop %v920
    %v937 = vrcp.pop %v921
    %v938 = vrcp.pop %v922
    %v939 = vrcp.pop %v923
    %v940 = vrcp.pop %v924
    %v941 = vrcp.pop %v925
    %v942 = vmul.f32 %v846, %v926
    %v943 = vmul.f32 %v847, %v927
    %v944 = vmul.f32 %v848, %v928
    %v945 = vmul.f32 %v849, %v929
    %v946 = vmul.f32 %v850, %v930
    %v947 = vmul.f32 %v851, %v931
    %v948 = vmul.f32 %v852, %v932
    %v949 = vmul.f32 %v853, %v933
    %v950 = vmul.f32 %v854, %v934
    %v951 = vmul.f32 %v855, %v935
    %v952 = vmul.f32 %v856, %v936
    %v953 = vmul.f32 %v857, %v937
    %v954 = vmul.f32 %v858, %v938
    %v955 = vmul.f32 %v859, %v939
    %v956 = vmul.f32 %v860, %v940
    %v957 = vmul.f32 %v861, %v941
    %v958 = vpack.c.bf16 %v943, %v942
    %v959 = vpack.c.bf16 %v945, %v944
    %v960 = vpack.c.bf16 %v947, %v946
    %v961 = vpack.c.bf16 %v949, %v948
    %v962 = vpack.c.bf16 %v951, %v950
    %v963 = vpack.c.bf16 %v953, %v952
    %v964 = vpack.c.bf16 %v955, %v954
    %v965 = vpack.c.bf16 %v957, %v956
    %v966 = vlaneseq
    %v967 = vshrl.u32 %v966, 7
    %v968 = vsub.s32 0, %v967
    %v969 = vrot.slane %v137, %v968
    %v974 = vunpack.c.l.b16 %v102
    %v975 = vunpack.c.l.b16 %v103
    %v976 = vunpack.c.l.b16 %v104
    %v977 = vunpack.c.l.b16 %v105
    %v978 = vpack.c.b16 %v975, %v974
    %v979 = vpack.c.b16 %v977, %v976
    %v983 = vsel %vm447, %v958, 0
    %v986 = vsel %vm447, %v959, 0
    %v989 = vsel %vm447, %v960, 0
    %v992 = vsel %vm447, %v961, 0
    %v995 = vsel %vm447, %v962, 0
    %v998 = vsel %vm447, %v963, 0
    %v1001 = vsel %vm447, %v964, 0
    %v1004 = vsel %vm447, %v965, 0
    %1006 = vmatprep.subr.bf16.mxu0 0
    %1007 = vmatpush1.bf16.msra.mxu0 %v978
    %1008 = vmatprep.subr.bf16.mxu0 0
    %1009 = vmatpush1.bf16.msra.mxu0 %v979
    %1010 = vmatprep.subr.bf16.mxu0 0
    %1011 = vmatpush1.bf16.msra.mxu0 0
    %1012 = vmatprep.subr.bf16.mxu0 0
    %1013 = vmatpush1.bf16.msra.mxu0 0
    %1014 = vmatprep.subr.bf16.mxu0 0
    %1015 = vmatpush1.bf16.msra.mxu0 0
    %1016 = vmatprep.subr.bf16.mxu0 0
    %1017 = vmatpush1.bf16.msra.mxu0 0
    %1018 = vmatprep.subr.bf16.mxu0 0
    %1019 = vmatpush1.bf16.msra.mxu0 0
    %1020 = vmatprep.subr.bf16.mxu0 0
    %1021 = vmatpush1.bf16.msra.mxu0 0
    %1022 = vmatprep.subr.bf16.mxu0 0
    %1023 = vmatpush1.bf16.msra.mxu0 0
    %1024 = vmatprep.subr.bf16.mxu0 0
    %1025 = vmatpush1.bf16.msra.mxu0 0
    %1026 = vmatprep.subr.bf16.mxu0 0
    %1027 = vmatpush1.bf16.msra.mxu0 0
    %1028 = vmatprep.subr.bf16.mxu0 0
    %1029 = vmatpush1.bf16.msra.mxu0 0
    %1030 = vmatprep.subr.bf16.mxu0 0
    %1031 = vmatpush1.bf16.msra.mxu0 0
    %1032 = vmatprep.subr.bf16.mxu0 0
    %1033 = vmatpush1.bf16.msra.mxu0 0
    %1034 = vmatprep.subr.bf16.mxu0 0
    %1035 = vmatpush1.bf16.msra.mxu0 0
    %1036 = vmatprep.subr.bf16.mxu0 0
    %1037 = vmatpush1.bf16.msra.mxu0 0
    %1038 = vmatprep.mubr.bf16.mxu0 0
    %1039 = vmatmul.mubr.bf16.gmra.mrb[0].mxu0 %v983
    %v1040 = vpop.f32.mrb[0].mxu0
    %v1041 = vadd.f32 %v969, %v1040
    %v1042 = vpop.f32.mrb[0].mxu0
    %v1043 = vpop.f32.mrb[0].mxu0
    %v1044 = vadd.f32 %v969, %v1043
    %v1045 = vpop.f32.mrb[0].mxu0
    %1046 = vmatprep.mubr.bf16.mxu0 0
    %1047 = vmatmul.mubr.bf16.gmra.mrb[0].mxu0 %v986
    %v1048 = vpop.f32.mrb[0].mxu0
    %v1049 = vadd.f32 %v969, %v1048
    %v1050 = vpop.f32.mrb[0].mxu0
    %v1051 = vpop.f32.mrb[0].mxu0
    %v1052 = vadd.f32 %v969, %v1051
    %v1053 = vpop.f32.mrb[0].mxu0
    %1054 = vmatprep.mubr.bf16.mxu0 0
    %1055 = vmatmul.mubr.bf16.gmra.mrb[0].mxu0 %v989
    %v1056 = vpop.f32.mrb[0].mxu0
    %v1057 = vadd.f32 %v969, %v1056
    %v1058 = vpop.f32.mrb[0].mxu0
    %v1059 = vpop.f32.mrb[0].mxu0
    %v1060 = vadd.f32 %v969, %v1059
    %v1061 = vpop.f32.mrb[0].mxu0
    %1062 = vmatprep.mubr.bf16.mxu0 0
    %1063 = vmatmul.mubr.bf16.gmra.mrb[0].mxu0 %v992
    %v1064 = vpop.f32.mrb[0].mxu0
    %v1065 = vadd.f32 %v969, %v1064
    %v1066 = vpop.f32.mrb[0].mxu0
    %v1067 = vpop.f32.mrb[0].mxu0
    %v1068 = vadd.f32 %v969, %v1067
    %v1069 = vpop.f32.mrb[0].mxu0
    %1070 = vmatprep.mubr.bf16.mxu0 0
    %1071 = vmatmul.mubr.bf16.gmra.mrb[0].mxu0 %v995
    %v1072 = vpop.f32.mrb[0].mxu0
    %v1073 = vadd.f32 %v969, %v1072
    %v1074 = vpop.f32.mrb[0].mxu0
    %v1075 = vpop.f32.mrb[0].mxu0
    %v1076 = vadd.f32 %v969, %v1075
    %v1077 = vpop.f32.mrb[0].mxu0
    %1078 = vmatprep.mubr.bf16.mxu0 0
    %1079 = vmatmul.mubr.bf16.gmra.mrb[0].mxu0 %v998
    %v1080 = vpop.f32.mrb[0].mxu0
    %v1081 = vadd.f32 %v969, %v1080
    %v1082 = vpop.f32.mrb[0].mxu0
    %v1083 = vpop.f32.mrb[0].mxu0
    %v1084 = vadd.f32 %v969, %v1083
    %v1085 = vpop.f32.mrb[0].mxu0
    %1086 = vmatprep.mubr.bf16.mxu0 0
    %1087 = vmatmul.mubr.bf16.gmra.mrb[0].mxu0 %v1001
    %v1088 = vpop.f32.mrb[0].mxu0
    %v1089 = vadd.f32 %v969, %v1088
    %v1090 = vpop.f32.mrb[0].mxu0
    %v1091 = vpop.f32.mrb[0].mxu0
    %v1092 = vadd.f32 %v969, %v1091
    %v1093 = vpop.f32.mrb[0].mxu0
    %1094 = vmatprep.mubr.bf16.mxu0 0
    %1095 = vmatmul.mubr.bf16.gmra.mrb[0].mxu0 %v1004
    %v1096 = vpop.f32.mrb[0].mxu0
    %v1097 = vadd.f32 %v969, %v1096
    %v1098 = vpop.f32.mrb[0].mxu0
    %v1099 = vpop.f32.mrb[0].mxu0
    %v1100 = vadd.f32 %v969, %v1099
    %v1101 = vpop.f32.mrb[0].mxu0
    %1102 = vdwg.mxu0
    %v1103 = vsub.f32 0.0, %v1041
    %v1104 = vsub.f32 0.0, %v1044
    %v1105 = vsub.f32 0.0, %v1049
    %v1106 = vsub.f32 0.0, %v1052
    %v1107 = vsub.f32 0.0, %v1057
    %v1108 = vsub.f32 0.0, %v1060
    %v1109 = vsub.f32 0.0, %v1065
    %v1110 = vsub.f32 0.0, %v1068
    %v1111 = vsub.f32 0.0, %v1073
    %v1112 = vsub.f32 0.0, %v1076
    %v1113 = vsub.f32 0.0, %v1081
    %v1114 = vsub.f32 0.0, %v1084
    %v1115 = vsub.f32 0.0, %v1089
    %v1116 = vsub.f32 0.0, %v1092
    %v1117 = vsub.f32 0.0, %v1097
    %v1118 = vsub.f32 0.0, %v1100
    %v1119 = vmul.f32 %v1103, 1.442695
    %v1120 = vpow.pop %v1119
    %v1121 = vmul.f32 %v1104, 1.442695
    %v1122 = vpow.pop %v1121
    %v1123 = vmul.f32 %v1105, 1.442695
    %v1124 = vpow.pop %v1123
    %v1125 = vmul.f32 %v1106, 1.442695
    %v1126 = vpow.pop %v1125
    %v1127 = vmul.f32 %v1107, 1.442695
    %v1128 = vpow.pop %v1127
    %v1129 = vmul.f32 %v1108, 1.442695
    %v1130 = vpow.pop %v1129
    %v1131 = vmul.f32 %v1109, 1.442695
    %v1132 = vpow.pop %v1131
    %v1133 = vmul.f32 %v1110, 1.442695
    %v1134 = vpow.pop %v1133
    %v1135 = vmul.f32 %v1111, 1.442695
    %v1136 = vpow.pop %v1135
    %v1137 = vmul.f32 %v1112, 1.442695
    %v1138 = vpow.pop %v1137
    %v1139 = vmul.f32 %v1113, 1.442695
    %v1140 = vpow.pop %v1139
    %v1141 = vmul.f32 %v1114, 1.442695
    %v1142 = vpow.pop %v1141
    %v1143 = vmul.f32 %v1115, 1.442695
    %v1144 = vpow.pop %v1143
    %v1145 = vmul.f32 %v1116, 1.442695
    %v1146 = vpow.pop %v1145
    %v1147 = vmul.f32 %v1117, 1.442695
    %v1148 = vpow.pop %v1147
    %v1149 = vmul.f32 %v1118, 1.442695
    %v1150 = vpow.pop %v1149
    %v1151 = vadd.f32 %v1120, 1.0
    %v1152 = vadd.f32 %v1122, 1.0
    %v1153 = vadd.f32 %v1124, 1.0
    %v1154 = vadd.f32 %v1126, 1.0
    %v1155 = vadd.f32 %v1128, 1.0
    %v1156 = vadd.f32 %v1130, 1.0
    %v1157 = vadd.f32 %v1132, 1.0
    %v1158 = vadd.f32 %v1134, 1.0
    %v1159 = vadd.f32 %v1136, 1.0
    %v1160 = vadd.f32 %v1138, 1.0
    %v1161 = vadd.f32 %v1140, 1.0
    %v1162 = vadd.f32 %v1142, 1.0
    %v1163 = vadd.f32 %v1144, 1.0
    %v1164 = vadd.f32 %v1146, 1.0
    %v1165 = vadd.f32 %v1148, 1.0
    %v1166 = vadd.f32 %v1150, 1.0
    %v1167 = vrcp.pop %v1151
    %v1168 = vrcp.pop %v1152
    %v1169 = vrcp.pop %v1153
    %v1170 = vrcp.pop %v1154
    %v1171 = vrcp.pop %v1155
    %v1172 = vrcp.pop %v1156
    %v1173 = vrcp.pop %v1157
    %v1174 = vrcp.pop %v1158
    %v1175 = vrcp.pop %v1159
    %v1176 = vrcp.pop %v1160
    %v1177 = vrcp.pop %v1161
    %v1178 = vrcp.pop %v1162
    %v1179 = vrcp.pop %v1163
    %v1180 = vrcp.pop %v1164
    %v1181 = vrcp.pop %v1165
    %v1182 = vrcp.pop %v1166
    %v1183 = vmul.f32 %v1041, %v1167
    %v1184 = vmul.f32 %v1044, %v1168
    %v1185 = vmul.f32 %v1049, %v1169
    %v1186 = vmul.f32 %v1052, %v1170
    %v1187 = vmul.f32 %v1057, %v1171
    %v1188 = vmul.f32 %v1060, %v1172
    %v1189 = vmul.f32 %v1065, %v1173
    %v1190 = vmul.f32 %v1068, %v1174
    %v1191 = vmul.f32 %v1073, %v1175
    %v1192 = vmul.f32 %v1076, %v1176
    %v1193 = vmul.f32 %v1081, %v1177
    %v1194 = vmul.f32 %v1084, %v1178
    %v1195 = vmul.f32 %v1089, %v1179
    %v1196 = vmul.f32 %v1092, %v1180
    %v1197 = vmul.f32 %v1097, %v1181
    %v1198 = vmul.f32 %v1100, %v1182
    %1200 = vset.pattern.permute.xlu0 0
    %1201 = vperm.xlu0 %1200, %v76
    %v1202 = vpop.permute.xlu0 %1201
    %1205 = vset.pattern.permute.xlu0 0
    %1206 = vperm.xlu0 %1205, %v77
    %v1207 = vpop.permute.xlu0 %1206
    %1210 = vset.pattern.permute.xlu0 0
    %1211 = vperm.xlu0 %1210, %v78
    %v1212 = vpop.permute.xlu0 %1211
    %1215 = vset.pattern.permute.xlu0 0
    %1216 = vperm.xlu0 %1215, %v79
    %v1217 = vpop.permute.xlu0 %1216
    %1220 = vset.pattern.permute.xlu0 0
    %1221 = vperm.xlu0 %1220, %v80
    %v1222 = vpop.permute.xlu0 %1221
    %1225 = vset.pattern.permute.xlu0 0
    %1226 = vperm.xlu0 %1225, %v81
    %v1227 = vpop.permute.xlu0 %1226
    %1230 = vset.pattern.permute.xlu0 0
    %1231 = vperm.xlu0 %1230, %v82
    %v1232 = vpop.permute.xlu0 %1231
    %1235 = vset.pattern.permute.xlu0 0
    %1236 = vperm.xlu0 %1235, %v83
    %v1237 = vpop.permute.xlu0 %1236
    %1240 = vset.pattern.permute.xlu0 0
    %1241 = vperm.xlu0 %1240, %v84
    %v1242 = vpop.permute.xlu0 %1241
    %1245 = vset.pattern.permute.xlu0 0
    %1246 = vperm.xlu0 %1245, %v85
    %v1247 = vpop.permute.xlu0 %1246
    %1250 = vset.pattern.permute.xlu0 0
    %1251 = vperm.xlu0 %1250, %v86
    %v1252 = vpop.permute.xlu0 %1251
    %1255 = vset.pattern.permute.xlu0 0
    %1256 = vperm.xlu0 %1255, %v87
    %v1257 = vpop.permute.xlu0 %1256
    %1260 = vset.pattern.permute.xlu0 0
    %1261 = vperm.xlu0 %1260, %v88
    %v1262 = vpop.permute.xlu0 %1261
    %1265 = vset.pattern.permute.xlu0 0
    %1266 = vperm.xlu0 %1265, %v89
    %v1267 = vpop.permute.xlu0 %1266
    %1270 = vset.pattern.permute.xlu0 0
    %1271 = vperm.xlu0 %1270, %v90
    %v1272 = vpop.permute.xlu0 %1271
    %1275 = vset.pattern.permute.xlu0 0
    %1276 = vperm.xlu0 %1275, %v91
    %v1277 = vpop.permute.xlu0 %1276
    %v1279 = vmul.f32 %v1183, %v1202
    %v1280 = vmul.f32 %v1184, %v1207
    %v1281 = vmul.f32 %v1185, %v1212
    %v1282 = vmul.f32 %v1186, %v1217
    %v1283 = vmul.f32 %v1187, %v1222
    %v1284 = vmul.f32 %v1188, %v1227
    %v1285 = vmul.f32 %v1189, %v1232
    %v1286 = vmul.f32 %v1190, %v1237
    %v1287 = vmul.f32 %v1191, %v1242
    %v1288 = vmul.f32 %v1192, %v1247
    %v1289 = vmul.f32 %v1193, %v1252
    %v1290 = vmul.f32 %v1194, %v1257
    %v1291 = vmul.f32 %v1195, %v1262
    %v1292 = vmul.f32 %v1196, %v1267
    %v1293 = vmul.f32 %v1197, %v1272
    %v1294 = vmul.f32 %v1198, %v1277
    %v1295 = vpack.c.bf16 %v1280, %v1279
    %v1296 = vpack.c.bf16 %v1282, %v1281
    %v1297 = vpack.c.bf16 %v1284, %v1283
    %v1298 = vpack.c.bf16 %v1286, %v1285
    %v1299 = vpack.c.bf16 %v1288, %v1287
    %v1300 = vpack.c.bf16 %v1290, %v1289
    %v1301 = vpack.c.bf16 %v1292, %v1291
    %v1302 = vpack.c.bf16 %v1294, %v1293
    %v1303 = vlaneseq
    %v1304 = vshrl.u32 %v1303, 7
    %v1305 = vsub.s32 0, %v1304
    %v1306 = vrot.slane %v138, %v1305
    %v1311 = vunpack.c.l.b16 %v107
    %v1312 = vunpack.c.l.b16 %v108
    %v1313 = vunpack.c.l.b16 %v109
    %v1314 = vunpack.c.l.b16 %v110
    %v1315 = vpack.c.b16 %v1312, %v1311
    %v1316 = vpack.c.b16 %v1314, %v1313
    %v1320 = vsel %vm447, %v1295, 0
    %v1323 = vsel %vm447, %v1296, 0
    %v1326 = vsel %vm447, %v1297, 0
    %v1329 = vsel %vm447, %v1298, 0
    %v1332 = vsel %vm447, %v1299, 0
    %v1335 = vsel %vm447, %v1300, 0
    %v1338 = vsel %vm447, %v1301, 0
    %v1341 = vsel %vm447, %v1302, 0
    %1343 = vmatprep.subr.bf16.mxu0 0
    %1344 = vmatpush1.bf16.msra.mxu0 %v1315
    %1345 = vmatprep.subr.bf16.mxu0 0
    %1346 = vmatpush1.bf16.msra.mxu0 %v1316
    %1347 = vmatprep.subr.bf16.mxu0 0
    %1348 = vmatpush1.bf16.msra.mxu0 0
    %1349 = vmatprep.subr.bf16.mxu0 0
    %1350 = vmatpush1.bf16.msra.mxu0 0
    %1351 = vmatprep.subr.bf16.mxu0 0
    %1352 = vmatpush1.bf16.msra.mxu0 0
    %1353 = vmatprep.subr.bf16.mxu0 0
    %1354 = vmatpush1.bf16.msra.mxu0 0
    %1355 = vmatprep.subr.bf16.mxu0 0
    %1356 = vmatpush1.bf16.msra.mxu0 0
    %1357 = vmatprep.subr.bf16.mxu0 0
    %1358 = vmatpush1.bf16.msra.mxu0 0
    %1359 = vmatprep.subr.bf16.mxu0 0
    %1360 = vmatpush1.bf16.msra.mxu0 0
    %1361 = vmatprep.subr.bf16.mxu0 0
    %1362 = vmatpush1.bf16.msra.mxu0 0
    %1363 = vmatprep.subr.bf16.mxu0 0
    %1364 = vmatpush1.bf16.msra.mxu0 0
    %1365 = vmatprep.subr.bf16.mxu0 0
    %1366 = vmatpush1.bf16.msra.mxu0 0
    %1367 = vmatprep.subr.bf16.mxu0 0
    %1368 = vmatpush1.bf16.msra.mxu0 0
    %1369 = vmatprep.subr.bf16.mxu0 0
    %1370 = vmatpush1.bf16.msra.mxu0 0
    %1371 = vmatprep.subr.bf16.mxu0 0
    %1372 = vmatpush1.bf16.msra.mxu0 0
    %1373 = vmatprep.subr.bf16.mxu0 0
    %1374 = vmatpush1.bf16.msra.mxu0 0
    %1375 = vmatprep.mubr.bf16.mxu0 0
    %1376 = vmatmul.mubr.bf16.gmra.mrb[0].mxu0 %v1320
    %v1377 = vpop.f32.mrb[0].mxu0
    %v1378 = vadd.f32 %v1306, %v1377
    %v1379 = vpop.f32.mrb[0].mxu0
    %v1380 = vpop.f32.mrb[0].mxu0
    %v1381 = vadd.f32 %v1306, %v1380
    %v1382 = vpop.f32.mrb[0].mxu0
    %1383 = vmatprep.mubr.bf16.mxu0 0
    %1384 = vmatmul.mubr.bf16.gmra.mrb[0].mxu0 %v1323
    %v1385 = vpop.f32.mrb[0].mxu0
    %v1386 = vadd.f32 %v1306, %v1385
    %v1387 = vpop.f32.mrb[0].mxu0
    %v1388 = vpop.f32.mrb[0].mxu0
    %v1389 = vadd.f32 %v1306, %v1388
    %v1390 = vpop.f32.mrb[0].mxu0
    %1391 = vmatprep.mubr.bf16.mxu0 0
    %1392 = vmatmul.mubr.bf16.gmra.mrb[0].mxu0 %v1326
    %v1393 = vpop.f32.mrb[0].mxu0
    %v1394 = vadd.f32 %v1306, %v1393
    %v1395 = vpop.f32.mrb[0].mxu0
    %v1396 = vpop.f32.mrb[0].mxu0
    %v1397 = vadd.f32 %v1306, %v1396
    %v1398 = vpop.f32.mrb[0].mxu0
    %1399 = vmatprep.mubr.bf16.mxu0 0
    %1400 = vmatmul.mubr.bf16.gmra.mrb[0].mxu0 %v1329
    %v1401 = vpop.f32.mrb[0].mxu0
    %v1402 = vadd.f32 %v1306, %v1401
    %v1403 = vpop.f32.mrb[0].mxu0
    %v1404 = vpop.f32.mrb[0].mxu0
    %v1405 = vadd.f32 %v1306, %v1404
    %v1406 = vpop.f32.mrb[0].mxu0
    %1407 = vmatprep.mubr.bf16.mxu0 0
    %1408 = vmatmul.mubr.bf16.gmra.mrb[0].mxu0 %v1332
    %v1409 = vpop.f32.mrb[0].mxu0
    %v1410 = vadd.f32 %v1306, %v1409
    %v1411 = vpop.f32.mrb[0].mxu0
    %v1412 = vpop.f32.mrb[0].mxu0
    %v1413 = vadd.f32 %v1306, %v1412
    %v1414 = vpop.f32.mrb[0].mxu0
    %1415 = vmatprep.mubr.bf16.mxu0 0
    %1416 = vmatmul.mubr.bf16.gmra.mrb[0].mxu0 %v1335
    %v1417 = vpop.f32.mrb[0].mxu0
    %v1418 = vadd.f32 %v1306, %v1417
    %v1419 = vpop.f32.mrb[0].mxu0
    %v1420 = vpop.f32.mrb[0].mxu0
    %v1421 = vadd.f32 %v1306, %v1420
    %v1422 = vpop.f32.mrb[0].mxu0
    %1423 = vmatprep.mubr.bf16.mxu0 0
    %1424 = vmatmul.mubr.bf16.gmra.mrb[0].mxu0 %v1338
    %v1425 = vpop.f32.mrb[0].mxu0
    %v1426 = vadd.f32 %v1306, %v1425
    %v1427 = vpop.f32.mrb[0].mxu0
    %v1428 = vpop.f32.mrb[0].mxu0
    %v1429 = vadd.f32 %v1306, %v1428
    %v1430 = vpop.f32.mrb[0].mxu0
    %1431 = vmatprep.mubr.bf16.mxu0 0
    %1432 = vmatmul.mubr.bf16.gmra.mrb[0].mxu0 %v1341
    %v1433 = vpop.f32.mrb[0].mxu0
    %v1434 = vadd.f32 %v1306, %v1433
    %v1435 = vpop.f32.mrb[0].mxu0
    %v1436 = vpop.f32.mrb[0].mxu0
    %v1437 = vadd.f32 %v1306, %v1436
    %v1438 = vpop.f32.mrb[0].mxu0
    %1439 = vdwg.mxu0
    %v1440 = vsub.f32 0.0, %v1378
    %v1441 = vsub.f32 0.0, %v1381
    %v1442 = vsub.f32 0.0, %v1386
    %v1443 = vsub.f32 0.0, %v1389
    %v1444 = vsub.f32 0.0, %v1394
    %v1445 = vsub.f32 0.0, %v1397
    %v1446 = vsub.f32 0.0, %v1402
    %v1447 = vsub.f32 0.0, %v1405
    %v1448 = vsub.f32 0.0, %v1410
    %v1449 = vsub.f32 0.0, %v1413
    %v1450 = vsub.f32 0.0, %v1418
    %v1451 = vsub.f32 0.0, %v1421
    %v1452 = vsub.f32 0.0, %v1426
    %v1453 = vsub.f32 0.0, %v1429
    %v1454 = vsub.f32 0.0, %v1434
    %v1455 = vsub.f32 0.0, %v1437
    %v1456 = vmul.f32 %v1440, 1.442695
    %v1457 = vpow.pop %v1456
    %v1458 = vmul.f32 %v1441, 1.442695
    %v1459 = vpow.pop %v1458
    %v1460 = vmul.f32 %v1442, 1.442695
    %v1461 = vpow.pop %v1460
    %v1462 = vmul.f32 %v1443, 1.442695
    %v1463 = vpow.pop %v1462
    %v1464 = vmul.f32 %v1444, 1.442695
    %v1465 = vpow.pop %v1464
    %v1466 = vmul.f32 %v1445, 1.442695
    %v1467 = vpow.pop %v1466
    %v1468 = vmul.f32 %v1446, 1.442695
    %v1469 = vpow.pop %v1468
    %v1470 = vmul.f32 %v1447, 1.442695
    %v1471 = vpow.pop %v1470
    %v1472 = vmul.f32 %v1448, 1.442695
    %v1473 = vpow.pop %v1472
    %v1474 = vmul.f32 %v1449, 1.442695
    %v1475 = vpow.pop %v1474
    %v1476 = vmul.f32 %v1450, 1.442695
    %v1477 = vpow.pop %v1476
    %v1478 = vmul.f32 %v1451, 1.442695
    %v1479 = vpow.pop %v1478
    %v1480 = vmul.f32 %v1452, 1.442695
    %v1481 = vpow.pop %v1480
    %v1482 = vmul.f32 %v1453, 1.442695
    %v1483 = vpow.pop %v1482
    %v1484 = vmul.f32 %v1454, 1.442695
    %v1485 = vpow.pop %v1484
    %v1486 = vmul.f32 %v1455, 1.442695
    %v1487 = vpow.pop %v1486
    %v1488 = vadd.f32 %v1457, 1.0
    %v1489 = vadd.f32 %v1459, 1.0
    %v1490 = vadd.f32 %v1461, 1.0
    %v1491 = vadd.f32 %v1463, 1.0
    %v1492 = vadd.f32 %v1465, 1.0
    %v1493 = vadd.f32 %v1467, 1.0
    %v1494 = vadd.f32 %v1469, 1.0
    %v1495 = vadd.f32 %v1471, 1.0
    %v1496 = vadd.f32 %v1473, 1.0
    %v1497 = vadd.f32 %v1475, 1.0
    %v1498 = vadd.f32 %v1477, 1.0
    %v1499 = vadd.f32 %v1479, 1.0
    %v1500 = vadd.f32 %v1481, 1.0
    %v1501 = vadd.f32 %v1483, 1.0
    %v1502 = vadd.f32 %v1485, 1.0
    %v1503 = vadd.f32 %v1487, 1.0
    %v1504 = vrcp.pop %v1488
    %v1505 = vrcp.pop %v1489
    %v1506 = vrcp.pop %v1490
    %v1507 = vrcp.pop %v1491
    %v1508 = vrcp.pop %v1492
    %v1509 = vrcp.pop %v1493
    %v1510 = vrcp.pop %v1494
    %v1511 = vrcp.pop %v1495
    %v1512 = vrcp.pop %v1496
    %v1513 = vrcp.pop %v1497
    %v1514 = vrcp.pop %v1498
    %v1515 = vrcp.pop %v1499
    %v1516 = vrcp.pop %v1500
    %v1517 = vrcp.pop %v1501
    %v1518 = vrcp.pop %v1502
    %v1519 = vrcp.pop %v1503
    %v1520 = vmul.f32 %v1378, %v1504
    %v1521 = vmul.f32 %v1381, %v1505
    %v1522 = vmul.f32 %v1386, %v1506
    %v1523 = vmul.f32 %v1389, %v1507
    %v1524 = vmul.f32 %v1394, %v1508
    %v1525 = vmul.f32 %v1397, %v1509
    %v1526 = vmul.f32 %v1402, %v1510
    %v1527 = vmul.f32 %v1405, %v1511
    %v1528 = vmul.f32 %v1410, %v1512
    %v1529 = vmul.f32 %v1413, %v1513
    %v1530 = vmul.f32 %v1418, %v1514
    %v1531 = vmul.f32 %v1421, %v1515
    %v1532 = vmul.f32 %v1426, %v1516
    %v1533 = vmul.f32 %v1429, %v1517
    %v1534 = vmul.f32 %v1434, %v1518
    %v1535 = vmul.f32 %v1437, %v1519
    %v1536 = vpack.c.bf16 %v1521, %v1520
    %v1537 = vpack.c.bf16 %v1523, %v1522
    %v1538 = vpack.c.bf16 %v1525, %v1524
    %v1539 = vpack.c.bf16 %v1527, %v1526
    %v1540 = vpack.c.bf16 %v1529, %v1528
    %v1541 = vpack.c.bf16 %v1531, %v1530
    %v1542 = vpack.c.bf16 %v1533, %v1532
    %v1543 = vpack.c.bf16 %v1535, %v1534
    %v1544 = vlaneseq
    %v1545 = vshrl.u32 %v1544, 7
    %v1546 = vsub.s32 0, %v1545
    %v1547 = vrot.slane %v142, %v1546
    %v1552 = vunpack.c.l.b16 %v132
    %v1553 = vunpack.c.l.b16 %v133
    %v1554 = vunpack.c.l.b16 %v134
    %v1555 = vunpack.c.l.b16 %v135
    %v1556 = vpack.c.b16 %v1553, %v1552
    %v1557 = vpack.c.b16 %v1555, %v1554
    %v1561 = vsel %vm447, %v1536, 0
    %v1564 = vsel %vm447, %v1537, 0
    %v1567 = vsel %vm447, %v1538, 0
    %v1570 = vsel %vm447, %v1539, 0
    %v1573 = vsel %vm447, %v1540, 0
    %v1576 = vsel %vm447, %v1541, 0
    %v1579 = vsel %vm447, %v1542, 0
    %v1582 = vsel %vm447, %v1543, 0
    %1584 = vmatprep.subr.bf16.mxu0 0
    %1585 = vmatpush1.bf16.msra.mxu0 %v1556
    %1586 = vmatprep.subr.bf16.mxu0 0
    %1587 = vmatpush1.bf16.msra.mxu0 %v1557
    %1588 = vmatprep.subr.bf16.mxu0 0
    %1589 = vmatpush1.bf16.msra.mxu0 0
    %1590 = vmatprep.subr.bf16.mxu0 0
    %1591 = vmatpush1.bf16.msra.mxu0 0
    %1592 = vmatprep.subr.bf16.mxu0 0
    %1593 = vmatpush1.bf16.msra.mxu0 0
    %1594 = vmatprep.subr.bf16.mxu0 0
    %1595 = vmatpush1.bf16.msra.mxu0 0
    %1596 = vmatprep.subr.bf16.mxu0 0
    %1597 = vmatpush1.bf16.msra.mxu0 0
    %1598 = vmatprep.subr.bf16.mxu0 0
    %1599 = vmatpush1.bf16.msra.mxu0 0
    %1600 = vmatprep.subr.bf16.mxu0 0
    %1601 = vmatpush1.bf16.msra.mxu0 0
    %1602 = vmatprep.subr.bf16.mxu0 0
    %1603 = vmatpush1.bf16.msra.mxu0 0
    %1604 = vmatprep.subr.bf16.mxu0 0
    %1605 = vmatpush1.bf16.msra.mxu0 0
    %1606 = vmatprep.subr.bf16.mxu0 0
    %1607 = vmatpush1.bf16.msra.mxu0 0
    %1608 = vmatprep.subr.bf16.mxu0 0
    %1609 = vmatpush1.bf16.msra.mxu0 0
    %1610 = vmatprep.subr.bf16.mxu0 0
    %1611 = vmatpush1.bf16.msra.mxu0 0
    %1612 = vmatprep.subr.bf16.mxu0 0
    %1613 = vmatpush1.bf16.msra.mxu0 0
    %1614 = vmatprep.subr.bf16.mxu0 0
    %1615 = vmatpush1.bf16.msra.mxu0 0
    %1616 = vmatprep.mubr.bf16.mxu0 0
    %1617 = vmatmul.mubr.bf16.gmra.mrb[0].mxu0 %v1561
    %v1618 = vpop.f32.mrb[0].mxu0
    %v1619 = vadd.f32 %v1547, %v1618
    %v1620 = vpop.f32.mrb[0].mxu0
    %v1621 = vpop.f32.mrb[0].mxu0
    %v1622 = vadd.f32 %v1547, %v1621
    %v1623 = vpop.f32.mrb[0].mxu0
    %1624 = vmatprep.mubr.bf16.mxu0 0
    %1625 = vmatmul.mubr.bf16.gmra.mrb[0].mxu0 %v1564
    %v1626 = vpop.f32.mrb[0].mxu0
    %v1627 = vadd.f32 %v1547, %v1626
    %v1628 = vpop.f32.mrb[0].mxu0
    %v1629 = vpop.f32.mrb[0].mxu0
    %v1630 = vadd.f32 %v1547, %v1629
    %v1631 = vpop.f32.mrb[0].mxu0
    %1632 = vmatprep.mubr.bf16.mxu0 0
    %1633 = vmatmul.mubr.bf16.gmra.mrb[0].mxu0 %v1567
    %v1634 = vpop.f32.mrb[0].mxu0
    %v1635 = vadd.f32 %v1547, %v1634
    %v1636 = vpop.f32.mrb[0].mxu0
    %v1637 = vpop.f32.mrb[0].mxu0
    %v1638 = vadd.f32 %v1547, %v1637
    %v1639 = vpop.f32.mrb[0].mxu0
    %1640 = vmatprep.mubr.bf16.mxu0 0
    %1641 = vmatmul.mubr.bf16.gmra.mrb[0].mxu0 %v1570
    %v1642 = vpop.f32.mrb[0].mxu0
    %v1643 = vadd.f32 %v1547, %v1642
    %v1644 = vpop.f32.mrb[0].mxu0
    %v1645 = vpop.f32.mrb[0].mxu0
    %v1646 = vadd.f32 %v1547, %v1645
    %v1647 = vpop.f32.mrb[0].mxu0
    %1648 = vmatprep.mubr.bf16.mxu0 0
    %1649 = vmatmul.mubr.bf16.gmra.mrb[0].mxu0 %v1573
    %v1650 = vpop.f32.mrb[0].mxu0
    %v1651 = vadd.f32 %v1547, %v1650
    %v1652 = vpop.f32.mrb[0].mxu0
    %v1653 = vpop.f32.mrb[0].mxu0
    %v1654 = vadd.f32 %v1547, %v1653
    %v1655 = vpop.f32.mrb[0].mxu0
    %1656 = vmatprep.mubr.bf16.mxu0 0
    %1657 = vmatmul.mubr.bf16.gmra.mrb[0].mxu0 %v1576
    %v1658 = vpop.f32.mrb[0].mxu0
    %v1659 = vadd.f32 %v1547, %v1658
    %v1660 = vpop.f32.mrb[0].mxu0
    %v1661 = vpop.f32.mrb[0].mxu0
    %v1662 = vadd.f32 %v1547, %v1661
    %v1663 = vpop.f32.mrb[0].mxu0
    %1664 = vmatprep.mubr.bf16.mxu0 0
    %1665 = vmatmul.mubr.bf16.gmra.mrb[0].mxu0 %v1579
    %v1666 = vpop.f32.mrb[0].mxu0
    %v1667 = vadd.f32 %v1547, %v1666
    %v1668 = vpop.f32.mrb[0].mxu0
    %v1669 = vpop.f32.mrb[0].mxu0
    %v1670 = vadd.f32 %v1547, %v1669
    %v1671 = vpop.f32.mrb[0].mxu0
    %1672 = vmatprep.mubr.bf16.mxu0 0
    %1673 = vmatmul.mubr.bf16.gmra.mrb[0].mxu0 %v1582
    %v1674 = vpop.f32.mrb[0].mxu0
    %v1675 = vadd.f32 %v1547, %v1674
    %v1676 = vpop.f32.mrb[0].mxu0
    %v1677 = vpop.f32.mrb[0].mxu0
    %v1678 = vadd.f32 %v1547, %v1677
    %v1679 = vpop.f32.mrb[0].mxu0
    %1680 = vdwg.mxu0
    %1682 = vset.pattern.permute.xlu0 0
    %1683 = vperm.xlu0 %1682, %v1619
    %v1684 = vpop.permute.xlu0 %1683
    %1687 = vset.pattern.permute.xlu0 0
    %1688 = vperm.xlu0 %1687, %v1622
    %v1689 = vpop.permute.xlu0 %1688
    %1692 = vset.pattern.permute.xlu0 0
    %1693 = vperm.xlu0 %1692, %v1627
    %v1694 = vpop.permute.xlu0 %1693
    %1697 = vset.pattern.permute.xlu0 0
    %1698 = vperm.xlu0 %1697, %v1630
    %v1699 = vpop.permute.xlu0 %1698
    %1702 = vset.pattern.permute.xlu0 0
    %1703 = vperm.xlu0 %1702, %v1635
    %v1704 = vpop.permute.xlu0 %1703
    %1707 = vset.pattern.permute.xlu0 0
    %1708 = vperm.xlu0 %1707, %v1638
    %v1709 = vpop.permute.xlu0 %1708
    %1712 = vset.pattern.permute.xlu0 0
    %1713 = vperm.xlu0 %1712, %v1643
    %v1714 = vpop.permute.xlu0 %1713
    %1717 = vset.pattern.permute.xlu0 0
    %1718 = vperm.xlu0 %1717, %v1646
    %v1719 = vpop.permute.xlu0 %1718
    %1722 = vset.pattern.permute.xlu0 0
    %1723 = vperm.xlu0 %1722, %v1651
    %v1724 = vpop.permute.xlu0 %1723
    %1727 = vset.pattern.permute.xlu0 0
    %1728 = vperm.xlu0 %1727, %v1654
    %v1729 = vpop.permute.xlu0 %1728
    %1732 = vset.pattern.permute.xlu0 0
    %1733 = vperm.xlu0 %1732, %v1659
    %v1734 = vpop.permute.xlu0 %1733
    %1737 = vset.pattern.permute.xlu0 0
    %1738 = vperm.xlu0 %1737, %v1662
    %v1739 = vpop.permute.xlu0 %1738
    %1742 = vset.pattern.permute.xlu0 0
    %1743 = vperm.xlu0 %1742, %v1667
    %v1744 = vpop.permute.xlu0 %1743
    %1747 = vset.pattern.permute.xlu0 0
    %1748 = vperm.xlu0 %1747, %v1670
    %v1749 = vpop.permute.xlu0 %1748
    %1752 = vset.pattern.permute.xlu0 0
    %1753 = vperm.xlu0 %1752, %v1675
    %v1754 = vpop.permute.xlu0 %1753
    %1757 = vset.pattern.permute.xlu0 0
    %1758 = vperm.xlu0 %1757, %v1678
    %v1759 = vpop.permute.xlu0 %1758
    %v1761 = vmul.f32 %v60, %v1684
    %v1762 = vmul.f32 %v61, %v1689
    %v1763 = vmul.f32 %v62, %v1694
    %v1764 = vmul.f32 %v63, %v1699
    %v1765 = vmul.f32 %v64, %v1704
    %v1766 = vmul.f32 %v65, %v1709
    %v1767 = vmul.f32 %v66, %v1714
    %v1768 = vmul.f32 %v67, %v1719
    %v1769 = vmul.f32 %v68, %v1724
    %v1770 = vmul.f32 %v69, %v1729
    %v1771 = vmul.f32 %v70, %v1734
    %v1772 = vmul.f32 %v71, %v1739
    %v1773 = vmul.f32 %v72, %v1744
    %v1774 = vmul.f32 %v73, %v1749
    %v1775 = vmul.f32 %v74, %v1754
    %v1776 = vmul.f32 %v75, %v1759
    %v1777 = vmul.f32 %v1761, %v1202
    %v1778 = vmul.f32 %v1762, %v1207
    %v1779 = vmul.f32 %v1763, %v1212
    %v1780 = vmul.f32 %v1764, %v1217
    %v1781 = vmul.f32 %v1765, %v1222
    %v1782 = vmul.f32 %v1766, %v1227
    %v1783 = vmul.f32 %v1767, %v1232
    %v1784 = vmul.f32 %v1768, %v1237
    %v1785 = vmul.f32 %v1769, %v1242
    %v1786 = vmul.f32 %v1770, %v1247
    %v1787 = vmul.f32 %v1771, %v1252
    %v1788 = vmul.f32 %v1772, %v1257
    %v1789 = vmul.f32 %v1773, %v1262
    %v1790 = vmul.f32 %v1774, %v1267
    %v1791 = vmul.f32 %v1775, %v1272
    %v1792 = vmul.f32 %v1776, %v1277
    %v1793 = vadd.f32 %v1279, %v1283
    %v1794 = vadd.f32 %v1280, %v1284
    %v1795 = vadd.f32 %v1281, %v1285
    %v1796 = vadd.f32 %v1282, %v1286
    %v1797 = vadd.f32 %v1777, %v1781
    %v1798 = vadd.f32 %v1778, %v1782
    %v1799 = vadd.f32 %v1779, %v1783
    %v1800 = vadd.f32 %v1780, %v1784
    %v1801 = vadd.f32 %v76, %v80
    %v1802 = vadd.f32 %v77, %v81
    %v1803 = vadd.f32 %v78, %v82
    %v1804 = vadd.f32 %v79, %v83
    %v1805 = vadd.f32 %v1793, %v1287
    %v1806 = vadd.f32 %v1794, %v1288
    %v1807 = vadd.f32 %v1795, %v1289
    %v1808 = vadd.f32 %v1796, %v1290
    %v1809 = vadd.f32 %v1797, %v1785
    %v1810 = vadd.f32 %v1798, %v1786
    %v1811 = vadd.f32 %v1799, %v1787
    %v1812 = vadd.f32 %v1800, %v1788
    %v1813 = vadd.f32 %v1801, %v84
    %v1814 = vadd.f32 %v1802, %v85
    %v1815 = vadd.f32 %v1803, %v86
    %v1816 = vadd.f32 %v1804, %v87
    %v1817 = vadd.f32 %v1805, %v1291
    %v1818 = vadd.f32 %v1806, %v1292
    %v1819 = vadd.f32 %v1807, %v1293
    %v1820 = vadd.f32 %v1808, %v1294
    %v1821 = vadd.f32 %v1809, %v1789
    %v1822 = vadd.f32 %v1810, %v1790
    %v1823 = vadd.f32 %v1811, %v1791
    %v1824 = vadd.f32 %v1812, %v1792
    %v1825 = vadd.f32 %v1813, %v88
    %v1826 = vadd.f32 %v1814, %v89
    %v1827 = vadd.f32 %v1815, %v90
    %v1828 = vadd.f32 %v1816, %v91
    %v1829 = vadd.f32 %v1825, 1e-06
    %v1830 = vadd.f32 %v1826, 1e-06
    %v1831 = vadd.f32 %v1827, 1e-06
    %v1832 = vadd.f32 %v1828, 1e-06
    %1834 = vset.pattern.permute.xlu0 0
    %1835 = vperm.xlu0 %1834, %v1829
    %v1836 = vpop.permute.xlu0 %1835
    %1839 = vset.pattern.permute.xlu0 0
    %1840 = vperm.xlu0 %1839, %v1830
    %v1841 = vpop.permute.xlu0 %1840
    %1844 = vset.pattern.permute.xlu0 0
    %1845 = vperm.xlu0 %1844, %v1831
    %v1846 = vpop.permute.xlu0 %1845
    %1849 = vset.pattern.permute.xlu0 0
    %1850 = vperm.xlu0 %1849, %v1832
    %v1851 = vpop.permute.xlu0 %1850
    %v1853 = vrcp.pop %v1836
    %v1854 = vmul.f32 %v1821, %v1853
    %v1855 = vrcp.pop %v1841
    %v1856 = vmul.f32 %v1822, %v1855
    %v1857 = vrcp.pop %v1846
    %v1858 = vmul.f32 %v1823, %v1857
    %v1859 = vrcp.pop %v1851
    %v1860 = vmul.f32 %v1824, %v1859
    %v1861 = vlaneseq
    %v1862 = vshrl.u32 %v1861, 7
    %v1863 = vsub.s32 0, %v1862
    %v1864 = vrot.slane %v139, %v1863
    %v1869 = vunpack.c.l.b16 %v112
    %v1870 = vunpack.c.l.b16 %v113
    %v1871 = vunpack.c.l.b16 %v114
    %v1872 = vunpack.c.l.b16 %v115
    %v1873 = vpack.c.b16 %v1870, %v1869
    %v1874 = vpack.c.b16 %v1872, %v1871
    %1877 = vmatprep.subr.bf16.mxu0 0
    %1878 = vmatpush1.bf16.msra.mxu0 %v1873
    %1879 = vmatprep.subr.bf16.mxu0 0
    %1880 = vmatpush1.bf16.msra.mxu0 %v1874
    %1881 = vmatprep.subr.bf16.mxu0 0
    %1882 = vmatpush1.bf16.msra.mxu0 0
    %1883 = vmatprep.subr.bf16.mxu0 0
    %1884 = vmatpush1.bf16.msra.mxu0 0
    %1885 = vmatprep.subr.bf16.mxu0 0
    %1886 = vmatpush1.bf16.msra.mxu0 0
    %1887 = vmatprep.subr.bf16.mxu0 0
    %1888 = vmatpush1.bf16.msra.mxu0 0
    %1889 = vmatprep.subr.bf16.mxu0 0
    %1890 = vmatpush1.bf16.msra.mxu0 0
    %1891 = vmatprep.subr.bf16.mxu0 0
    %1892 = vmatpush1.bf16.msra.mxu0 0
    %1893 = vmatprep.subr.bf16.mxu0 0
    %1894 = vmatpush1.bf16.msra.mxu0 0
    %1895 = vmatprep.subr.bf16.mxu0 0
    %1896 = vmatpush1.bf16.msra.mxu0 0
    %1897 = vmatprep.subr.bf16.mxu0 0
    %1898 = vmatpush1.bf16.msra.mxu0 0
    %1899 = vmatprep.subr.bf16.mxu0 0
    %1900 = vmatpush1.bf16.msra.mxu0 0
    %1901 = vmatprep.subr.bf16.mxu0 0
    %1902 = vmatpush1.bf16.msra.mxu0 0
    %1903 = vmatprep.subr.bf16.mxu0 0
    %1904 = vmatpush1.bf16.msra.mxu0 0
    %1905 = vmatprep.subr.bf16.mxu0 0
    %1906 = vmatpush1.bf16.msra.mxu0 0
    %1907 = vmatprep.subr.bf16.mxu0 0
    %1908 = vmatpush1.bf16.msra.mxu0 0
    %1909 = vmatprep.mubr.bf16.mxu0 0
    %1910 = vmatmul.mubr.bf16.gmra.mrb[0].mxu0 %v449
    %v1911 = vpop.f32.mrb[0].mxu0
    %v1912 = vadd.f32 %v1864, %v1911
    %v1913 = vpop.f32.mrb[0].mxu0
    %v1914 = vpop.f32.mrb[0].mxu0
    %v1915 = vadd.f32 %v1864, %v1914
    %v1916 = vpop.f32.mrb[0].mxu0
    %1917 = vmatprep.mubr.bf16.mxu0 0
    %1918 = vmatmul.mubr.bf16.gmra.mrb[0].mxu0 %v452
    %v1919 = vpop.f32.mrb[0].mxu0
    %v1920 = vadd.f32 %v1864, %v1919
    %v1921 = vpop.f32.mrb[0].mxu0
    %v1922 = vpop.f32.mrb[0].mxu0
    %v1923 = vadd.f32 %v1864, %v1922
    %v1924 = vpop.f32.mrb[0].mxu0
    %1925 = vdwg.mxu0
    %v1926 = vsub.f32 0.0, %v1912
    %v1927 = vsub.f32 0.0, %v1915
    %v1928 = vsub.f32 0.0, %v1920
    %v1929 = vsub.f32 0.0, %v1923
    %v1930 = vmul.f32 %v1926, 1.442695
    %v1931 = vpow.pop %v1930
    %v1932 = vmul.f32 %v1927, 1.442695
    %v1933 = vpow.pop %v1932
    %v1934 = vmul.f32 %v1928, 1.442695
    %v1935 = vpow.pop %v1934
    %v1936 = vmul.f32 %v1929, 1.442695
    %v1937 = vpow.pop %v1936
    %v1938 = vadd.f32 %v1931, 1.0
    %v1939 = vadd.f32 %v1933, 1.0
    %v1940 = vadd.f32 %v1935, 1.0
    %v1941 = vadd.f32 %v1937, 1.0
    %v1942 = vrcp.pop %v1938
    %v1943 = vrcp.pop %v1939
    %v1944 = vrcp.pop %v1940
    %v1945 = vrcp.pop %v1941
    %v1946 = vmul.f32 %v1912, %v1942
    %v1947 = vmul.f32 %v1915, %v1943
    %v1948 = vmul.f32 %v1920, %v1944
    %v1949 = vmul.f32 %v1923, %v1945
    %v1950 = vpack.c.bf16 %v1947, %v1946
    %v1951 = vpack.c.bf16 %v1949, %v1948
    %v1952 = vlaneseq
    %v1953 = vshrl.u32 %v1952, 7
    %v1954 = vsub.s32 0, %v1953
    %v1955 = vrot.slane %v143, %v1954
    %1956 = vrot.lane.b32.xlu0 %v1556, 127
    %v1957 = vpop.permute.xlu0 %1956
    %1958 = vrot.lane.b32.xlu0 %v1557, 127
    %v1959 = vpop.permute.xlu0 %1958
    %v1963 = vsel %vm447, %v1950, 0
    %v1966 = vsel %vm447, %v1951, 0
    %1968 = vmatprep.subr.bf16.mxu0 0
    %1969 = vmatpush1.bf16.msra.mxu0 %v1957
    %1970 = vmatprep.subr.bf16.mxu0 0
    %1971 = vmatpush1.bf16.msra.mxu0 %v1959
    %1972 = vmatprep.subr.bf16.mxu0 0
    %1973 = vmatpush1.bf16.msra.mxu0 0
    %1974 = vmatprep.subr.bf16.mxu0 0
    %1975 = vmatpush1.bf16.msra.mxu0 0
    %1976 = vmatprep.subr.bf16.mxu0 0
    %1977 = vmatpush1.bf16.msra.mxu0 0
    %1978 = vmatprep.subr.bf16.mxu0 0
    %1979 = vmatpush1.bf16.msra.mxu0 0
    %1980 = vmatprep.subr.bf16.mxu0 0
    %1981 = vmatpush1.bf16.msra.mxu0 0
    %1982 = vmatprep.subr.bf16.mxu0 0
    %1983 = vmatpush1.bf16.msra.mxu0 0
    %1984 = vmatprep.subr.bf16.mxu0 0
    %1985 = vmatpush1.bf16.msra.mxu0 0
    %1986 = vmatprep.subr.bf16.mxu0 0
    %1987 = vmatpush1.bf16.msra.mxu0 0
    %1988 = vmatprep.subr.bf16.mxu0 0
    %1989 = vmatpush1.bf16.msra.mxu0 0
    %1990 = vmatprep.subr.bf16.mxu0 0
    %1991 = vmatpush1.bf16.msra.mxu0 0
    %1992 = vmatprep.subr.bf16.mxu0 0
    %1993 = vmatpush1.bf16.msra.mxu0 0
    %1994 = vmatprep.subr.bf16.mxu0 0
    %1995 = vmatpush1.bf16.msra.mxu0 0
    %1996 = vmatprep.subr.bf16.mxu0 0
    %1997 = vmatpush1.bf16.msra.mxu0 0
    %1998 = vmatprep.subr.bf16.mxu0 0
    %1999 = vmatpush1.bf16.msra.mxu0 0
    %2000 = vmatprep.mubr.bf16.mxu0 0
    %2001 = vmatmul.mubr.bf16.gmra.mrb[0].mxu0 %v1963
    %v2002 = vpop.f32.mrb[0].mxu0
    %v2003 = vadd.f32 %v1955, %v2002
    %v2004 = vpop.f32.mrb[0].mxu0
    %v2005 = vpop.f32.mrb[0].mxu0
    %v2006 = vadd.f32 %v1955, %v2005
    %v2007 = vpop.f32.mrb[0].mxu0
    %2008 = vmatprep.mubr.bf16.mxu0 0
    %2009 = vmatmul.mubr.bf16.gmra.mrb[0].mxu0 %v1966
    %v2010 = vpop.f32.mrb[0].mxu0
    %v2011 = vadd.f32 %v1955, %v2010
    %v2012 = vpop.f32.mrb[0].mxu0
    %v2013 = vpop.f32.mrb[0].mxu0
    %v2014 = vadd.f32 %v1955, %v2013
    %v2015 = vpop.f32.mrb[0].mxu0
    %2016 = vdwg.mxu0
    %2018 = vset.pattern.permute.xlu0 0
    %2019 = vperm.xlu0 %2018, %v2003
    %v2020 = vpop.permute.xlu0 %2019
    %2023 = vset.pattern.permute.xlu0 0
    %2024 = vperm.xlu0 %2023, %v2006
    %v2025 = vpop.permute.xlu0 %2024
    %2028 = vset.pattern.permute.xlu0 0
    %2029 = vperm.xlu0 %2028, %v2011
    %v2030 = vpop.permute.xlu0 %2029
    %2033 = vset.pattern.permute.xlu0 0
    %2034 = vperm.xlu0 %2033, %v2014
    %v2035 = vpop.permute.xlu0 %2034
    %v2037 = vmul.f32 %v2020, %v36
    %v2038 = vmul.f32 %v2025, %v37
    %v2039 = vmul.f32 %v2030, %v38
    %v2040 = vmul.f32 %v2035, %v39
    %2045 = vrot.lane.b32.xlu0 %v1854, 4
    %v2046 = vpop.permute.xlu0 %2045
    %2047 = vrot.lane.b32.xlu0 %v1856, 4
    %v2048 = vpop.permute.xlu0 %2047
    %2049 = vrot.lane.b32.xlu0 %v1858, 4
    %v2050 = vpop.permute.xlu0 %2049
    %2051 = vrot.lane.b32.xlu0 %v1860, 4
    %v2052 = vpop.permute.xlu0 %2051
    %v2057 = vadd.f32 %v2037, %v2046
    %v2058 = vadd.f32 %v2038, %v2048
    %v2059 = vadd.f32 %v2039, %v2050
    %v2060 = vadd.f32 %v2040, %v2052
    %2065 = vrot.lane.b32.xlu0 %v2057, 126
    %v2066 = vpop.permute.xlu0 %2065
    %2067 = vrot.lane.b32.xlu0 %v2058, 126
    %v2068 = vpop.permute.xlu0 %2067
    %2069 = vrot.lane.b32.xlu0 %v2059, 126
    %v2070 = vpop.permute.xlu0 %2069
    %2071 = vrot.lane.b32.xlu0 %v2060, 126
    %v2072 = vpop.permute.xlu0 %2071
    %v2077 = vadd.f32 %v36, %v2066
    %v2078 = vadd.f32 %v37, %v2068
    %v2079 = vadd.f32 %v38, %v2070
    %v2080 = vadd.f32 %v39, %v2072
    %2085 = vrot.lane.b32.xlu0 %v2077, 126
    %v2086 = vpop.permute.xlu0 %2085
    %2087 = vrot.lane.b32.xlu0 %v2078, 126
    %v2088 = vpop.permute.xlu0 %2087
    %2089 = vrot.lane.b32.xlu0 %v2079, 126
    %v2090 = vpop.permute.xlu0 %2089
    %2091 = vrot.lane.b32.xlu0 %v2080, 126
    %v2092 = vpop.permute.xlu0 %2091
    %v2097 = vadd.f32 %v36, %v2086
    %v2098 = vadd.f32 %v37, %v2088
    %v2099 = vadd.f32 %v38, %v2090
    %v2100 = vadd.f32 %v39, %v2092
    %v2101 = vpack.c.bf16 %v1818, %v1817
    %v2102 = vpack.c.bf16 %v1820, %v1819
    %v2107 = vunpack.c.l.b16 %v122
    %v2108 = vunpack.c.l.b16 %v123
    %v2109 = vunpack.c.l.b16 %v124
    %v2110 = vunpack.c.l.b16 %v125
    %v2111 = vpack.c.b16 %v2108, %v2107
    %v2112 = vpack.c.b16 %v2110, %v2109
    %v2116 = vsel %vm447, %v2101, 0
    %v2119 = vsel %vm447, %v2102, 0
    %2121 = vmatprep.subr.bf16.mxu0 0
    %2122 = vmatpush1.bf16.msra.mxu0 %v2111
    %2123 = vmatprep.subr.bf16.mxu0 0
    %2124 = vmatpush1.bf16.msra.mxu0 %v2112
    %2125 = vmatprep.subr.bf16.mxu0 0
    %2126 = vmatpush1.bf16.msra.mxu0 0
    %2127 = vmatprep.subr.bf16.mxu0 0
    %2128 = vmatpush1.bf16.msra.mxu0 0
    %2129 = vmatprep.subr.bf16.mxu0 0
    %2130 = vmatpush1.bf16.msra.mxu0 0
    %2131 = vmatprep.subr.bf16.mxu0 0
    %2132 = vmatpush1.bf16.msra.mxu0 0
    %2133 = vmatprep.subr.bf16.mxu0 0
    %2134 = vmatpush1.bf16.msra.mxu0 0
    %2135 = vmatprep.subr.bf16.mxu0 0
    %2136 = vmatpush1.bf16.msra.mxu0 0
    %2137 = vmatprep.subr.bf16.mxu0 0
    %2138 = vmatpush1.bf16.msra.mxu0 0
    %2139 = vmatprep.subr.bf16.mxu0 0
    %2140 = vmatpush1.bf16.msra.mxu0 0
    %2141 = vmatprep.subr.bf16.mxu0 0
    %2142 = vmatpush1.bf16.msra.mxu0 0
    %2143 = vmatprep.subr.bf16.mxu0 0
    %2144 = vmatpush1.bf16.msra.mxu0 0
    %2145 = vmatprep.subr.bf16.mxu0 0
    %2146 = vmatpush1.bf16.msra.mxu0 0
    %2147 = vmatprep.subr.bf16.mxu0 0
    %2148 = vmatpush1.bf16.msra.mxu0 0
    %2149 = vmatprep.subr.bf16.mxu0 0
    %2150 = vmatpush1.bf16.msra.mxu0 0
    %2151 = vmatprep.subr.bf16.mxu0 0
    %2152 = vmatpush1.bf16.msra.mxu0 0
    %2153 = vmatprep.mubr.bf16.mxu0 0
    %2154 = vmatmul.mubr.bf16.gmra.mrb[0].mxu0 %v2116
    %v2155 = vpop.f32.mrb[0].mxu0
    %v2156 = vadd.f32 0.0, %v2155
    %v2157 = vpop.f32.mrb[0].mxu0
    %v2158 = vpop.f32.mrb[0].mxu0
    %v2159 = vadd.f32 0.0, %v2158
    %v2160 = vpop.f32.mrb[0].mxu0
    %2161 = vmatprep.mubr.bf16.mxu0 0
    %2162 = vmatmul.mubr.bf16.gmra.mrb[0].mxu0 %v2119
    %v2163 = vpop.f32.mrb[0].mxu0
    %v2164 = vadd.f32 0.0, %v2163
    %v2165 = vpop.f32.mrb[0].mxu0
    %v2166 = vpop.f32.mrb[0].mxu0
    %v2167 = vadd.f32 0.0, %v2166
    %v2168 = vpop.f32.mrb[0].mxu0
    %2169 = vdwg.mxu0
    %v2174 = vunpack.c.l.b16 %v117
    %v2175 = vunpack.c.l.b16 %v118
    %v2176 = vunpack.c.l.b16 %v119
    %v2177 = vunpack.c.l.b16 %v120
    %v2178 = vpack.c.b16 %v2175, %v2174
    %v2179 = vpack.c.b16 %v2177, %v2176
    %2182 = vmatprep.subr.bf16.mxu0 0
    %2183 = vmatpush1.bf16.msra.mxu0 %v2178
    %2184 = vmatprep.subr.bf16.mxu0 0
    %2185 = vmatpush1.bf16.msra.mxu0 %v2179
    %2186 = vmatprep.subr.bf16.mxu0 0
    %2187 = vmatpush1.bf16.msra.mxu0 0
    %2188 = vmatprep.subr.bf16.mxu0 0
    %2189 = vmatpush1.bf16.msra.mxu0 0
    %2190 = vmatprep.subr.bf16.mxu0 0
    %2191 = vmatpush1.bf16.msra.mxu0 0
    %2192 = vmatprep.subr.bf16.mxu0 0
    %2193 = vmatpush1.bf16.msra.mxu0 0
    %2194 = vmatprep.subr.bf16.mxu0 0
    %2195 = vmatpush1.bf16.msra.mxu0 0
    %2196 = vmatprep.subr.bf16.mxu0 0
    %2197 = vmatpush1.bf16.msra.mxu0 0
    %2198 = vmatprep.subr.bf16.mxu0 0
    %2199 = vmatpush1.bf16.msra.mxu0 0
    %2200 = vmatprep.subr.bf16.mxu0 0
    %2201 = vmatpush1.bf16.msra.mxu0 0
    %2202 = vmatprep.subr.bf16.mxu0 0
    %2203 = vmatpush1.bf16.msra.mxu0 0
    %2204 = vmatprep.subr.bf16.mxu0 0
    %2205 = vmatpush1.bf16.msra.mxu0 0
    %2206 = vmatprep.subr.bf16.mxu0 0
    %2207 = vmatpush1.bf16.msra.mxu0 0
    %2208 = vmatprep.subr.bf16.mxu0 0
    %2209 = vmatpush1.bf16.msra.mxu0 0
    %2210 = vmatprep.subr.bf16.mxu0 0
    %2211 = vmatpush1.bf16.msra.mxu0 0
    %2212 = vmatprep.subr.bf16.mxu0 0
    %2213 = vmatpush1.bf16.msra.mxu0 0
    %2214 = vmatprep.mubr.bf16.mxu0 0
    %2215 = vmatmul.mubr.bf16.gmra.mrb[0].mxu0 %v449
    %v2216 = vpop.f32.mrb[0].mxu0
    %v2217 = vadd.f32 %v2156, %v2216
    %v2218 = vpop.f32.mrb[0].mxu0
    %v2219 = vpop.f32.mrb[0].mxu0
    %v2220 = vadd.f32 %v2159, %v2219
    %v2221 = vpop.f32.mrb[0].mxu0
    %2222 = vmatprep.mubr.bf16.mxu0 0
    %2223 = vmatmul.mubr.bf16.gmra.mrb[0].mxu0 %v452
    %v2224 = vpop.f32.mrb[0].mxu0
    %v2225 = vadd.f32 %v2164, %v2224
    %v2226 = vpop.f32.mrb[0].mxu0
    %v2227 = vpop.f32.mrb[0].mxu0
    %v2228 = vadd.f32 %v2167, %v2227
    %v2229 = vpop.f32.mrb[0].mxu0
    %2230 = vdwg.mxu0
    %v2231 = vlaneseq
    %v2232 = vshrl.u32 %v2231, 7
    %v2233 = vsub.s32 0, %v2232
    %v2234 = vrot.slane %v140, %v2233
    %v2235 = vadd.f32 %v2217, %v2234
    %v2236 = vadd.f32 %v2220, %v2234
    %v2237 = vadd.f32 %v2225, %v2234
    %v2238 = vadd.f32 %v2228, %v2234
    %v2239 = vsub.f32 0.0, %v2235
    %v2240 = vsub.f32 0.0, %v2236
    %v2241 = vsub.f32 0.0, %v2237
    %v2242 = vsub.f32 0.0, %v2238
    %v2243 = vmul.f32 %v2239, 1.442695
    %v2244 = vpow.pop %v2243
    %v2245 = vmul.f32 %v2240, 1.442695
    %v2246 = vpow.pop %v2245
    %v2247 = vmul.f32 %v2241, 1.442695
    %v2248 = vpow.pop %v2247
    %v2249 = vmul.f32 %v2242, 1.442695
    %v2250 = vpow.pop %v2249
    %v2251 = vadd.f32 %v2244, 1.0
    %v2252 = vadd.f32 %v2246, 1.0
    %v2253 = vadd.f32 %v2248, 1.0
    %v2254 = vadd.f32 %v2250, 1.0
    %v2255 = vrcp.pop %v2251
    %v2256 = vrcp.pop %v2252
    %v2257 = vrcp.pop %v2253
    %v2258 = vrcp.pop %v2254
    %v2259 = vmul.f32 %v2235, %v2255
    %v2260 = vmul.f32 %v2236, %v2256
    %v2261 = vmul.f32 %v2237, %v2257
    %v2262 = vmul.f32 %v2238, %v2258
    %v2263 = vpack.c.bf16 %v2260, %v2259
    %v2264 = vpack.c.bf16 %v2262, %v2261
    %v2265 = vlaneseq
    %v2266 = vshrl.u32 %v2265, 7
    %v2267 = vsub.s32 0, %v2266
    %v2268 = vrot.slane %v141, %v2267
    %v2273 = vunpack.c.l.b16 %v127
    %v2274 = vunpack.c.l.b16 %v128
    %v2275 = vunpack.c.l.b16 %v129
    %v2276 = vunpack.c.l.b16 %v130
    %v2277 = vpack.c.b16 %v2274, %v2273
    %v2278 = vpack.c.b16 %v2276, %v2275
    %v2282 = vsel %vm447, %v2263, 0
    %v2285 = vsel %vm447, %v2264, 0
    %2287 = vmatprep.subr.bf16.mxu0 0
    %2288 = vmatpush1.bf16.msra.mxu0 %v2277
    %2289 = vmatprep.subr.bf16.mxu0 0
    %2290 = vmatpush1.bf16.msra.mxu0 %v2278
    %2291 = vmatprep.subr.bf16.mxu0 0
    %2292 = vmatpush1.bf16.msra.mxu0 0
    %2293 = vmatprep.subr.bf16.mxu0 0
    %2294 = vmatpush1.bf16.msra.mxu0 0
    %2295 = vmatprep.subr.bf16.mxu0 0
    %2296 = vmatpush1.bf16.msra.mxu0 0
    %2297 = vmatprep.subr.bf16.mxu0 0
    %2298 = vmatpush1.bf16.msra.mxu0 0
    %2299 = vmatprep.subr.bf16.mxu0 0
    %2300 = vmatpush1.bf16.msra.mxu0 0
    %2301 = vmatprep.subr.bf16.mxu0 0
    %2302 = vmatpush1.bf16.msra.mxu0 0
    %2303 = vmatprep.subr.bf16.mxu0 0
    %2304 = vmatpush1.bf16.msra.mxu0 0
    %2305 = vmatprep.subr.bf16.mxu0 0
    %2306 = vmatpush1.bf16.msra.mxu0 0
    %2307 = vmatprep.subr.bf16.mxu0 0
    %2308 = vmatpush1.bf16.msra.mxu0 0
    %2309 = vmatprep.subr.bf16.mxu0 0
    %2310 = vmatpush1.bf16.msra.mxu0 0
    %2311 = vmatprep.subr.bf16.mxu0 0
    %2312 = vmatpush1.bf16.msra.mxu0 0
    %2313 = vmatprep.subr.bf16.mxu0 0
    %2314 = vmatpush1.bf16.msra.mxu0 0
    %2315 = vmatprep.subr.bf16.mxu0 0
    %2316 = vmatpush1.bf16.msra.mxu0 0
    %2317 = vmatprep.subr.bf16.mxu0 0
    %2318 = vmatpush1.bf16.msra.mxu0 0
    %2319 = vmatprep.mubr.bf16.mxu0 0
    %2320 = vmatmul.mubr.bf16.gmra.mrb[0].mxu0 %v2282
    %v2321 = vpop.f32.mrb[0].mxu0
    %v2322 = vadd.f32 %v2268, %v2321
    %v2323 = vpop.f32.mrb[0].mxu0
    %v2324 = vpop.f32.mrb[0].mxu0
    %v2325 = vadd.f32 %v2268, %v2324
    %v2326 = vpop.f32.mrb[0].mxu0
    %2327 = vmatprep.mubr.bf16.mxu0 0
    %2328 = vmatmul.mubr.bf16.gmra.mrb[0].mxu0 %v2285
    %v2329 = vpop.f32.mrb[0].mxu0
    %v2330 = vadd.f32 %v2268, %v2329
    %v2331 = vpop.f32.mrb[0].mxu0
    %v2332 = vpop.f32.mrb[0].mxu0
    %v2333 = vadd.f32 %v2268, %v2332
    %v2334 = vpop.f32.mrb[0].mxu0
    %2335 = vdwg.mxu0
    %v2336 = vadd.f32 %v40, %v2322
    %v2337 = vadd.f32 %v41, %v2325
    %v2338 = vadd.f32 %v42, %v2330
    %v2339 = vadd.f32 %v43, %v2333
    %2340 = vst.msk [vmem:[#allocation2] sm:$0xff] %vm447, %v2336
    %2341 = vst.msk [vmem:[#allocation2 + $0x8] sm:$0xff] %vm447, %v2337
    %2342 = vst.msk [vmem:[#allocation2 + $0x10] sm:$0xff] %vm447, %v2338
    %2343 = vst.msk [vmem:[#allocation2 + $0x18] sm:$0xff] %vm447, %v2339
    %2344 = vst.msk [vmem:[%s9] sm:$0xff] %vm700, %v2097
    %2345 = vst.msk [vmem:[%s9 + $0x8] sm:$0xff] %vm700, %v2098
    %2346 = vst.msk [vmem:[%s9 + $0x10] sm:$0xff] %vm700, %v2099
    %2347 = vst.msk [vmem:[%s9 + $0x18] sm:$0xff] %vm700, %v2100
    %vm2348 = vcmask 31760
    %2349 = vst.msk [vmem:[%s9] sm:$0xff] %vm2348, %v2077
    %2350 = vst.msk [vmem:[%s9 + $0x8] sm:$0xff] %vm2348, %v2078
    %2351 = vst.msk [vmem:[%s9 + $0x10] sm:$0xff] %vm2348, %v2079
    %2352 = vst.msk [vmem:[%s9 + $0x18] sm:$0xff] %vm2348, %v2080
    %vm2353 = vcmask 48160
    %2354 = vst.msk [vmem:[%s9] sm:$0xff] %vm2353, %v2057
    %2355 = vst.msk [vmem:[%s9 + $0x8] sm:$0xff] %vm2353, %v2058
    %2356 = vst.msk [vmem:[%s9 + $0x10] sm:$0xff] %vm2353, %v2059
    %2357 = vst.msk [vmem:[%s9 + $0x18] sm:$0xff] %vm2353, %v2060
    // Predicated region
    $region38: #{tpu_custom_call.1} parent=1 // pred_check
      _
    $region39: #{tpu_custom_call.1} parent=1 // pred_check_branch
      %2359 = sbr.rel (0) target = $region41
    $region40: #{tpu_custom_call.1} parent=1 // pred_region
      _
    $region41: #{tpu_custom_call.1} parent=1 // pred_fallthru
      _
    // Predicated region
    $region42: #{tpu_custom_call.1} parent=1 // pred_check
      _
    $region43: #{tpu_custom_call.1} parent=1 // pred_check_branch
      %2361 = sbr.rel (0) target = $region45
    $region44: #{tpu_custom_call.1} parent=1 // pred_region
      %s2363 = ssub.s32 512, 512
      %2364 = vsyncadd [#allocation3], %s2363
      %s2365 = sshll.u32 [#allocation2], 4
      %s2366 = int_to_ptr.vmem [resolvable:$true] %s2365
      %2371 = dma.vmem_to_hbm [thread:$0]  %s2366, 512, %s10, [#allocation3], 128, 128, 8
    $region45: #{tpu_custom_call.1} parent=1 // pred_fallthru
      _
    // Predicated region
    $region46: #{tpu_custom_call.1} parent=1 // pred_check
      _
    $region47: #{tpu_custom_call.1} parent=1 // pred_check_branch
      %2373 = sbr.rel (0) target = $region49
    $region48: #{tpu_custom_call.1} parent=1 // pred_region
      _
    $region49: #{tpu_custom_call.1} parent=1 // pred_fallthru
      _
    // Predicated region
    $region50: #{tpu_custom_call.1} parent=1 // pred_check
      _
    $region51: #{tpu_custom_call.1} parent=1 // pred_check_branch
      %2375 = sbr.rel (0) target = $region53
    $region52: #{tpu_custom_call.1} parent=1 // pred_region
      %2376 = dma.done [#allocation3], 512
    $region53: #{tpu_custom_call.1} parent=1 // pred_fallthru
      _
    %2377 = vsyncpa [#allocation3], 1

</llo_original>
